<compile_context>
chip_gen: v6e
topology: v6e:2x2x1
jax: 0.10.0
libtpu: 0.0.40
codegen_flags: <defaults>
</compile_context>

<pallas_src>
import math
import jax
import jax.numpy as jnp
from jax import lax
from jax.experimental import pallas as pl
from jax.experimental.pallas import tpu as pltpu


# ---------------------------------------------------------------------------
# In-kernel math helpers (VPU/EUP friendly, f32)
# ---------------------------------------------------------------------------
def _layernorm(x, g, b, eps=1e-5):
    # PyTorch nn.LayerNorm: biased variance, eps inside sqrt.
    mu = jnp.mean(x, axis=-1, keepdims=True)
    var = jnp.mean((x - mu) ** 2, axis=-1, keepdims=True)
    return (x - mu) * lax.rsqrt(var + eps) * g + b


def _erf(x):
    # Abramowitz & Stegun 7.1.26 rational approximation, |err| <= 1.5e-7.
    a1, a2, a3, a4, a5 = (0.254829592, -0.284496736, 1.421413741,
                          -1.453152027, 1.061405429)
    p = 0.3275911
    s = jnp.where(x < 0.0, -1.0, 1.0)
    ax = jnp.abs(x)
    t = pl.reciprocal(1.0 + p * ax, approx=True)      # EUP slot, off VPU path
    poly = ((((a5 * t + a4) * t + a3) * t + a2) * t + a1) * t
    return s * (1.0 - poly * jnp.exp(-ax * ax))


def _gelu(x):
    # PyTorch nn.GELU() default = exact erf GELU (approximated as above).
    return 0.5 * x * (1.0 + _erf(x * (1.0 / math.sqrt(2.0))))


# ---------------------------------------------------------------------------
# Parameters (deterministic, module __init__ shapes; cross_attn=False,
# add_pos_embedding=True)
# ---------------------------------------------------------------------------
def init_params(key, dim):
    E = dim
    ks = jax.random.split(key, 16)
    n = lambda k, shape, s=0.05: s * jax.random.normal(k, shape, jnp.float32)
    return {
        "ln_input_w": 1.0 + 0.01 * jax.random.normal(ks[0], (E,), jnp.float32),
        "ln_input_b": 0.01 * jax.random.normal(ks[1], (E,), jnp.float32),
        "in_proj_weight": n(ks[2], (3 * E, E)),      # MultiheadAttention in_proj
        "in_proj_bias": n(ks[3], (3 * E,), 0.01),
        "out_proj_weight": n(ks[4], (E, E)),
        "out_proj_bias": n(ks[5], (E,), 0.01),
        "ln_self_w": 1.0 + 0.01 * jax.random.normal(ks[6], (E,), jnp.float32),
        "ln_self_b": 0.01 * jax.random.normal(ks[7], (E,), jnp.float32),
        "ff_w1": n(ks[8], (2 * E, E)),               # Linear(dim, 2*dim)
        "ff_b1": n(ks[9], (2 * E,), 0.01),
        "ff_w2": n(ks[10], (E, 2 * E)),              # Linear(2*dim, dim)
        "ff_b2": n(ks[11], (E,), 0.01),
        "ln_feed_w": 1.0 + 0.01 * jax.random.normal(ks[12], (E,), jnp.float32),
        "ln_feed_b": 0.01 * jax.random.normal(ks[13], (E,), jnp.float32),
    }


# ---------------------------------------------------------------------------
# Pallas implementation of AttnBlock.forward
# ---------------------------------------------------------------------------
def attn_block(q_tbe, params, num_heads):
    T, B, E = q_tbe.shape
    H = num_heads
    D = E // H
    assert H * D == E
    BT = B * T
    HT = H * T
    scale = 1.0 / math.sqrt(D)

    # --- glue: SinusoidalPosEmb(arange(T)), tiled batch-major to [B*T, E] ---
    half = E // 2
    freq = jnp.exp(jnp.arange(half, dtype=jnp.float32)
                   * (-math.log(10000.0) / (half - 1)))
    ang = jnp.arange(T, dtype=jnp.float32)[:, None] * freq[None, :]
    pe = jnp.concatenate([jnp.sin(ang), jnp.cos(ang)], axis=-1)        # [T, E]
    pe_tiled = jnp.tile(pe, (B, 1))                                    # [B*T, E]

    # --- glue: weights in x @ W form; fold 1/sqrt(D) into the Q columns ---
    qkv_scale = jnp.concatenate(
        [jnp.full((E,), scale, jnp.float32), jnp.ones((2 * E,), jnp.float32)])
    wqkv_t = (params["in_proj_weight"].T * qkv_scale[None, :]).astype(jnp.float32)  # [E,3E]
    bqkv = (params["in_proj_bias"] * qkv_scale)[None, :].astype(jnp.float32)        # [1,3E]
    wo_t = params["out_proj_weight"].T.astype(jnp.float32)             # [E, E]
    w1_t = params["ff_w1"].T.astype(jnp.float32)                       # [E, 2E]
    b1 = params["ff_b1"][None, :].astype(jnp.float32)                  # [1, 2E]
    w2_t = params["ff_w2"].T.astype(jnp.float32)                       # [2E, E]

    # --- glue: pack tiled pos-emb + all E-wide per-channel vectors ---
    vecs = jnp.concatenate(
        [pe_tiled,
         jnp.stack([params["ln_input_w"], params["ln_input_b"],
                    params["out_proj_bias"],
                    params["ln_self_w"], params["ln_self_b"],
                    params["ff_b2"],
                    params["ln_feed_w"], params["ln_feed_b"]], axis=0)],
        axis=0).astype(jnp.float32)                                    # [B*T+8, E]
    R_LIN, R_BO, R_LSA, R_B2, R_LFF = BT, BT + 2, BT + 3, BT + 5, BT + 6

    # --- glue: constant block-diagonal structures for head-batched attention
    # head_mask[h*T+s, e] = 1 iff column e belongs to head h
    head_mask = ((jnp.arange(HT) // T)[:, None]
                 == (jnp.arange(E) // D)[None, :]).astype(jnp.float32)  # [H*T, E]
    # seg_ones[i, j] = 1 iff columns i, j are in the same head segment
    seg = jnp.arange(HT) // T
    seg_ones = (seg[:, None] == seg[None, :]).astype(jnp.float32)       # [H*T, H*T]

    # Kept host transpose: moves ~T*B*E*4 bytes (tiny); a (T,1,E) block over
    # the raw [T,B,E] array would violate the block-shape constraint at B=2.
    x_slab = jnp.transpose(q_tbe, (1, 0, 2)).reshape(BT, E).astype(jnp.float32)

    def kernel(x_ref, vecs_ref, mask_ref, seg_ref, wqkv_ref, bqkv_ref,
               wo_ref, w1_ref, b1_ref, w2_ref, o_ref):
        x_in = x_ref[...]                                 # [B*T, E] f32
        v = vecs_ref[...]                                 # [B*T+8, E] f32
        pe_rows = v[0:BT]                                 # [B*T, E]

        # x = q = ln_input(q);  x = x + pos_emb (broadcast over batch)
        q0 = _layernorm(x_in, v[R_LIN:R_LIN + 1], v[R_LIN + 1:R_LIN + 2])
        x = q0 + pe_rows

        # fused QKV projection on the full slab (1/sqrt(D) folded into Q cols)
        qkv = jnp.dot(x, wqkv_ref[...],
                      preferred_element_type=jnp.float32) + bqkv_ref[...]   # [B*T, 3E]
        Qa, Ka, Va = qkv[:, :E], qkv[:, E:2 * E], qkv[:, 2 * E:]

        # block-diagonal multi-head attention (no per-head slicing/stacking)
        mask = mask_ref[...]                               # [H*T, E]
        seg1 = seg_ref[...]                                # [H*T, H*T]
        outs = []
        for b in range(B):                                 # B=2, traced loop
            qb = Qa[b * T:(b + 1) * T]                     # cheap sublane slice
            kb = Ka[b * T:(b + 1) * T]
            vb = Va[b * T:(b + 1) * T]
            kexp = jnp.concatenate([kb] * H, axis=0) * mask    # [H*T, E]
            vexp = jnp.concatenate([vb] * H, axis=0) * mask    # [H*T, E]
            # S[t, h*T+s] = Q_h[t] . K_h[s]   (one dense matmul)
            s = lax.dot_general(qb, kexp, (((1,), (1,)), ((), ())),
                                preferred_element_type=jnp.float32)    # [T, H*T]
            # per-row (all heads) max: >= per-segment max, so per-segment
            # softmax below is mathematically identical and stays stable.
            m = jnp.max(s, axis=-1, keepdims=True)
            pexp = jnp.exp(s - m)
            # per-segment sums broadcast across each segment via one matmul
            denom = jnp.dot(pexp, seg1, preferred_element_type=jnp.float32)
            p = pexp * pl.reciprocal(denom, approx=True)
            outs.append(jnp.dot(p, vexp, preferred_element_type=jnp.float32))  # [T, E]
        attn_o = jnp.concatenate(outs, axis=0)             # [B*T, E], head-contiguous

        # single dense out-projection
        sa = jnp.dot(attn_o, wo_ref[...],
                     preferred_element_type=jnp.float32) + v[R_BO:R_BO + 1]

        # q = q + ln_self(self_attn(x, x, x)[0])
        q1 = q0 + _layernorm(sa, v[R_LSA:R_LSA + 1], v[R_LSA + 1:R_LSA + 2])

        # feed_forward: Linear -> GELU -> Linear
        h1 = _gelu(jnp.dot(q1, w1_ref[...],
                           preferred_element_type=jnp.float32) + b1_ref[...])
        ff = jnp.dot(h1, w2_ref[...],
                     preferred_element_type=jnp.float32) + v[R_B2:R_B2 + 1]

        # out = ln_feed(ff) + q
        out = _layernorm(ff, v[R_LFF:R_LFF + 1], v[R_LFF + 1:R_LFF + 2]) + q1
        o_ref[...] = out.astype(o_ref.dtype)

    def full_spec(arr):
        nd = arr.ndim
        return pl.BlockSpec(arr.shape, lambda i, _nd=nd: (0,) * _nd)

    operands = (x_slab, vecs, head_mask, seg_ones, wqkv_t, bqkv,
                wo_t, w1_t, b1, w2_t)

    out_slab = pl.pallas_call(
        kernel,
        out_shape=jax.ShapeDtypeStruct((BT, E), jnp.float32),
        grid=(1,),                                         # single step: no per-step overhead
        in_specs=[full_spec(a) for a in operands],
        out_specs=pl.BlockSpec((BT, E), lambda i: (0, 0)),
        compiler_params=pltpu.CompilerParams(
            dimension_semantics=("arbitrary",),
            vmem_limit_bytes=32 * 1024 * 1024),
    )(*operands)

    return jnp.transpose(out_slab.reshape(B, T, E), (1, 0, 2))   # back to [T, B, E]


# ---------------------------------------------------------------------------
if __name__ == "__main__":
    T, B, E, H = 8, 2, 32, 4   # seq=8, batch=2, dim=32, num_heads=4
    q = jax.random.normal(jax.random.PRNGKey(0), (T, B, E), dtype=jnp.float32)
    params = init_params(jax.random.PRNGKey(1), E)

    out = attn_block(q, params, num_heads=H)
    out = jax.block_until_ready(out)

    assert out.shape == (T, B, E), out.shape
    assert bool(jnp.all(jnp.isfinite(out)))
    print("KERNEL_OK")
</pallas_src>

<mosaic_0001>
module attributes {stable_mosaic.version = 11 : i64} {
  func.func @kernel(%arg0: i32, %arg1: memref<16x32xf32, #tpu.memory_space<vmem>>, %arg2: memref<24x32xf32, #tpu.memory_space<vmem>>, %arg3: memref<32x32xf32, #tpu.memory_space<vmem>>, %arg4: memref<32x32xf32, #tpu.memory_space<vmem>>, %arg5: memref<32x96xf32, #tpu.memory_space<vmem>>, %arg6: memref<1x96xf32, #tpu.memory_space<vmem>>, %arg7: memref<32x32xf32, #tpu.memory_space<vmem>>, %arg8: memref<32x64xf32, #tpu.memory_space<vmem>>, %arg9: memref<1x64xf32, #tpu.memory_space<vmem>>, %arg10: memref<64x32xf32, #tpu.memory_space<vmem>>, %arg11: memref<16x32xf32, #tpu.memory_space<vmem>>) attributes {dimension_semantics = [#tpu.dimension_semantics<arbitrary>], iteration_bounds = array<i64: 1>, scalar_prefetch = 0 : i64, scratch_operands = 0 : i64, tpu.core_type = #tpu.core_type<tc>, window_params = [{pipeline_mode = #tpu.pipeline_mode<synchronous>, transform_indices = @transform_0, window_bounds = array<i64: 16, 32>}, {pipeline_mode = #tpu.pipeline_mode<synchronous>, transform_indices = @transform_1, window_bounds = array<i64: 24, 32>}, {pipeline_mode = #tpu.pipeline_mode<synchronous>, transform_indices = @transform_2, window_bounds = array<i64: 32, 32>}, {pipeline_mode = #tpu.pipeline_mode<synchronous>, transform_indices = @transform_3, window_bounds = array<i64: 32, 32>}, {pipeline_mode = #tpu.pipeline_mode<synchronous>, transform_indices = @transform_4, window_bounds = array<i64: 32, 96>}, {pipeline_mode = #tpu.pipeline_mode<synchronous>, transform_indices = @transform_5, window_bounds = array<i64: 1, 96>}, {pipeline_mode = #tpu.pipeline_mode<synchronous>, transform_indices = @transform_6, window_bounds = array<i64: 32, 32>}, {pipeline_mode = #tpu.pipeline_mode<synchronous>, transform_indices = @transform_7, window_bounds = array<i64: 32, 64>}, {pipeline_mode = #tpu.pipeline_mode<synchronous>, transform_indices = @transform_8, window_bounds = array<i64: 1, 64>}, {pipeline_mode = #tpu.pipeline_mode<synchronous>, transform_indices = @transform_9, window_bounds = array<i64: 64, 32>}, {pipeline_mode = #tpu.pipeline_mode<synchronous>, transform_indices = @transform_10, window_bounds = array<i64: 16, 32>}]} {
    %c0 = arith.constant 0 : index
    %c0_0 = arith.constant 0 : index
    %0 = vector.load %arg1[%c0, %c0_0] : memref<16x32xf32, #tpu.memory_space<vmem>>, vector<16x32xf32>
    %c0_1 = arith.constant 0 : index
    %c0_2 = arith.constant 0 : index
    %1 = vector.load %arg2[%c0_1, %c0_2] : memref<24x32xf32, #tpu.memory_space<vmem>>, vector<24x32xf32>
    %2 = vector.extract_strided_slice %1 {offsets = [0, 0], sizes = [16, 32], strides = [1, 1]} : vector<24x32xf32> to vector<16x32xf32>
    %3 = vector.extract_strided_slice %1 {offsets = [16, 0], sizes = [1, 32], strides = [1, 1]} : vector<24x32xf32> to vector<1x32xf32>
    %4 = vector.extract_strided_slice %1 {offsets = [17, 0], sizes = [1, 32], strides = [1, 1]} : vector<24x32xf32> to vector<1x32xf32>
    %cst = arith.constant dense<0.000000e+00> : vector<16xf32>
    %5 = vector.multi_reduction <add>, %0, %cst [1] : vector<16x32xf32> to vector<16xf32>
    %6 = vector.shape_cast %5 : vector<16xf32> to vector<16x1xf32>
    %cst_3 = arith.constant 3.200000e+01 : f32
    %7 = vector.broadcast %cst_3 : f32 to vector<16x1xf32>
    %8 = arith.divf %6, %7 : vector<16x1xf32>
    %9 = vector.broadcast %8 : vector<16x1xf32> to vector<16x32xf32>
    %10 = arith.subf %0, %9 : vector<16x32xf32>
    %11 = arith.mulf %10, %10 : vector<16x32xf32>
    %cst_4 = arith.constant dense<0.000000e+00> : vector<16xf32>
    %12 = vector.multi_reduction <add>, %11, %cst_4 [1] : vector<16x32xf32> to vector<16xf32>
    %13 = vector.shape_cast %12 : vector<16xf32> to vector<16x1xf32>
    %cst_5 = arith.constant 3.200000e+01 : f32
    %14 = vector.broadcast %cst_5 : f32 to vector<16x1xf32>
    %15 = arith.divf %13, %14 : vector<16x1xf32>
    %16 = vector.broadcast %8 : vector<16x1xf32> to vector<16x32xf32>
    %17 = arith.subf %0, %16 : vector<16x32xf32>
    %cst_6 = arith.constant 9.99999974E-6 : f32
    %18 = vector.broadcast %cst_6 : f32 to vector<16x1xf32>
    %19 = arith.addf %15, %18 : vector<16x1xf32>
    %20 = math.rsqrt %19 : vector<16x1xf32>
    %21 = vector.broadcast %20 : vector<16x1xf32> to vector<16x32xf32>
    %22 = arith.mulf %17, %21 : vector<16x32xf32>
    %23 = vector.broadcast %3 : vector<1x32xf32> to vector<16x32xf32>
    %24 = arith.mulf %22, %23 : vector<16x32xf32>
    %25 = vector.broadcast %4 : vector<1x32xf32> to vector<16x32xf32>
    %26 = arith.addf %24, %25 : vector<16x32xf32>
    %27 = arith.addf %26, %2 : vector<16x32xf32>
    %c0_7 = arith.constant 0 : index
    %c0_8 = arith.constant 0 : index
    %28 = vector.load %arg5[%c0_7, %c0_8] : memref<32x96xf32, #tpu.memory_space<vmem>>, vector<32x96xf32>
    %cst_9 = arith.constant dense<0.000000e+00> : vector<16x96xf32>
    %29 = tpu.matmul %27, %28, %cst_9 {dimension_numbers = #tpu.dot_dimension_numbers<[1], [0], [0], [1], [0, 0, 1, 1], [], []>} : vector<16x32xf32>, vector<32x96xf32>, vector<16x96xf32> -> vector<16x96xf32>
    %c0_10 = arith.constant 0 : index
    %c0_11 = arith.constant 0 : index
    %30 = vector.load %arg6[%c0_10, %c0_11] : memref<1x96xf32, #tpu.memory_space<vmem>>, vector<1x96xf32>
    %31 = vector.broadcast %30 : vector<1x96xf32> to vector<16x96xf32>
    %32 = arith.addf %29, %31 : vector<16x96xf32>
    %33 = vector.extract_strided_slice %32 {offsets = [0, 0], sizes = [16, 32], strides = [1, 1]} : vector<16x96xf32> to vector<16x32xf32>
    %34 = vector.extract_strided_slice %32 {offsets = [0, 32], sizes = [16, 32], strides = [1, 1]} : vector<16x96xf32> to vector<16x32xf32>
    %35 = vector.extract_strided_slice %32 {offsets = [0, 64], sizes = [16, 32], strides = [1, 1]} : vector<16x96xf32> to vector<16x32xf32>
    %c0_12 = arith.constant 0 : index
    %c0_13 = arith.constant 0 : index
    %36 = vector.load %arg3[%c0_12, %c0_13] : memref<32x32xf32, #tpu.memory_space<vmem>>, vector<32x32xf32>
    %c0_14 = arith.constant 0 : index
    %c0_15 = arith.constant 0 : index
    %37 = vector.load %arg4[%c0_14, %c0_15] : memref<32x32xf32, #tpu.memory_space<vmem>>, vector<32x32xf32>
    %38 = vector.extract_strided_slice %33 {offsets = [0, 0], sizes = [8, 32], strides = [1, 1]} : vector<16x32xf32> to vector<8x32xf32>
    %39 = vector.extract_strided_slice %34 {offsets = [0, 0], sizes = [8, 32], strides = [1, 1]} : vector<16x32xf32> to vector<8x32xf32>
    %40 = vector.extract_strided_slice %35 {offsets = [0, 0], sizes = [8, 32], strides = [1, 1]} : vector<16x32xf32> to vector<8x32xf32>
    %41 = tpu.concatenate %39, %39, %39, %39 in 0 : vector<8x32xf32>, vector<8x32xf32>, vector<8x32xf32>, vector<8x32xf32> -> vector<32x32xf32>
    %42 = arith.mulf %41, %36 : vector<32x32xf32>
    %43 = tpu.concatenate %40, %40, %40, %40 in 0 : vector<8x32xf32>, vector<8x32xf32>, vector<8x32xf32>, vector<8x32xf32> -> vector<32x32xf32>
    %44 = arith.mulf %43, %36 : vector<32x32xf32>
    %cst_16 = arith.constant dense<0.000000e+00> : vector<8x32xf32>
    %45 = tpu.matmul %38, %42, %cst_16 {dimension_numbers = #tpu.dot_dimension_numbers<[1], [1], [0], [0], [0, 0, 1, 0], [], []>} : vector<8x32xf32>, vector<32x32xf32>, vector<8x32xf32> -> vector<8x32xf32>
    %cst_17 = arith.constant dense<0xFF800000> : vector<8xf32>
    %46 = vector.multi_reduction <maximumf>, %45, %cst_17 [1] : vector<8x32xf32> to vector<8xf32>
    %47 = vector.shape_cast %46 : vector<8xf32> to vector<8x1xf32>
    %48 = vector.broadcast %47 : vector<8x1xf32> to vector<8x32xf32>
    %49 = arith.subf %45, %48 : vector<8x32xf32>
    %50 = math.exp %49 : vector<8x32xf32>
    %cst_18 = arith.constant dense<0.000000e+00> : vector<8x32xf32>
    %51 = tpu.matmul %50, %37, %cst_18 {dimension_numbers = #tpu.dot_dimension_numbers<[1], [0], [0], [1], [0, 0, 1, 1], [], []>} : vector<8x32xf32>, vector<32x32xf32>, vector<8x32xf32> -> vector<8x32xf32>
    %52 = tpu.reciprocal %51 {approx = true} : vector<8x32xf32> -> vector<8x32xf32>
    %53 = arith.mulf %50, %52 : vector<8x32xf32>
    %cst_19 = arith.constant dense<0.000000e+00> : vector<8x32xf32>
    %54 = tpu.matmul %53, %44, %cst_19 {dimension_numbers = #tpu.dot_dimension_numbers<[1], [0], [0], [1], [0, 0, 1, 1], [], []>} : vector<8x32xf32>, vector<32x32xf32>, vector<8x32xf32> -> vector<8x32xf32>
    %55 = vector.extract_strided_slice %33 {offsets = [8, 0], sizes = [8, 32], strides = [1, 1]} : vector<16x32xf32> to vector<8x32xf32>
    %56 = vector.extract_strided_slice %34 {offsets = [8, 0], sizes = [8, 32], strides = [1, 1]} : vector<16x32xf32> to vector<8x32xf32>
    %57 = vector.extract_strided_slice %35 {offsets = [8, 0], sizes = [8, 32], strides = [1, 1]} : vector<16x32xf32> to vector<8x32xf32>
    %58 = tpu.concatenate %56, %56, %56, %56 in 0 : vector<8x32xf32>, vector<8x32xf32>, vector<8x32xf32>, vector<8x32xf32> -> vector<32x32xf32>
    %59 = arith.mulf %58, %36 : vector<32x32xf32>
    %60 = tpu.concatenate %57, %57, %57, %57 in 0 : vector<8x32xf32>, vector<8x32xf32>, vector<8x32xf32>, vector<8x32xf32> -> vector<32x32xf32>
    %61 = arith.mulf %60, %36 : vector<32x32xf32>
    %cst_20 = arith.constant dense<0.000000e+00> : vector<8x32xf32>
    %62 = tpu.matmul %55, %59, %cst_20 {dimension_numbers = #tpu.dot_dimension_numbers<[1], [1], [0], [0], [0, 0, 1, 0], [], []>} : vector<8x32xf32>, vector<32x32xf32>, vector<8x32xf32> -> vector<8x32xf32>
    %cst_21 = arith.constant dense<0xFF800000> : vector<8xf32>
    %63 = vector.multi_reduction <maximumf>, %62, %cst_21 [1] : vector<8x32xf32> to vector<8xf32>
    %64 = vector.shape_cast %63 : vector<8xf32> to vector<8x1xf32>
    %65 = vector.broadcast %64 : vector<8x1xf32> to vector<8x32xf32>
    %66 = arith.subf %62, %65 : vector<8x32xf32>
    %67 = math.exp %66 : vector<8x32xf32>
    %cst_22 = arith.constant dense<0.000000e+00> : vector<8x32xf32>
    %68 = tpu.matmul %67, %37, %cst_22 {dimension_numbers = #tpu.dot_dimension_numbers<[1], [0], [0], [1], [0, 0, 1, 1], [], []>} : vector<8x32xf32>, vector<32x32xf32>, vector<8x32xf32> -> vector<8x32xf32>
    %69 = tpu.reciprocal %68 {approx = true} : vector<8x32xf32> -> vector<8x32xf32>
    %70 = arith.mulf %67, %69 : vector<8x32xf32>
    %cst_23 = arith.constant dense<0.000000e+00> : vector<8x32xf32>
    %71 = tpu.matmul %70, %61, %cst_23 {dimension_numbers = #tpu.dot_dimension_numbers<[1], [0], [0], [1], [0, 0, 1, 1], [], []>} : vector<8x32xf32>, vector<32x32xf32>, vector<8x32xf32> -> vector<8x32xf32>
    %72 = tpu.concatenate %54, %71 in 0 : vector<8x32xf32>, vector<8x32xf32> -> vector<16x32xf32>
    %c0_24 = arith.constant 0 : index
    %c0_25 = arith.constant 0 : index
    %73 = vector.load %arg7[%c0_24, %c0_25] : memref<32x32xf32, #tpu.memory_space<vmem>>, vector<32x32xf32>
    %cst_26 = arith.constant dense<0.000000e+00> : vector<16x32xf32>
    %74 = tpu.matmul %72, %73, %cst_26 {dimension_numbers = #tpu.dot_dimension_numbers<[1], [0], [0], [1], [0, 0, 1, 1], [], []>} : vector<16x32xf32>, vector<32x32xf32>, vector<16x32xf32> -> vector<16x32xf32>
    %75 = vector.extract_strided_slice %1 {offsets = [18, 0], sizes = [1, 32], strides = [1, 1]} : vector<24x32xf32> to vector<1x32xf32>
    %76 = vector.broadcast %75 : vector<1x32xf32> to vector<16x32xf32>
    %77 = arith.addf %74, %76 : vector<16x32xf32>
    %78 = vector.extract_strided_slice %1 {offsets = [19, 0], sizes = [1, 32], strides = [1, 1]} : vector<24x32xf32> to vector<1x32xf32>
    %79 = vector.extract_strided_slice %1 {offsets = [20, 0], sizes = [1, 32], strides = [1, 1]} : vector<24x32xf32> to vector<1x32xf32>
    %cst_27 = arith.constant dense<0.000000e+00> : vector<16xf32>
    %80 = vector.multi_reduction <add>, %77, %cst_27 [1] : vector<16x32xf32> to vector<16xf32>
    %81 = vector.shape_cast %80 : vector<16xf32> to vector<16x1xf32>
    %cst_28 = arith.constant 3.200000e+01 : f32
    %82 = vector.broadcast %cst_28 : f32 to vector<16x1xf32>
    %83 = arith.divf %81, %82 : vector<16x1xf32>
    %84 = vector.broadcast %83 : vector<16x1xf32> to vector<16x32xf32>
    %85 = arith.subf %77, %84 : vector<16x32xf32>
    %86 = arith.mulf %85, %85 : vector<16x32xf32>
    %cst_29 = arith.constant dense<0.000000e+00> : vector<16xf32>
    %87 = vector.multi_reduction <add>, %86, %cst_29 [1] : vector<16x32xf32> to vector<16xf32>
    %88 = vector.shape_cast %87 : vector<16xf32> to vector<16x1xf32>
    %cst_30 = arith.constant 3.200000e+01 : f32
    %89 = vector.broadcast %cst_30 : f32 to vector<16x1xf32>
    %90 = arith.divf %88, %89 : vector<16x1xf32>
    %91 = vector.broadcast %83 : vector<16x1xf32> to vector<16x32xf32>
    %92 = arith.subf %77, %91 : vector<16x32xf32>
    %cst_31 = arith.constant 9.99999974E-6 : f32
    %93 = vector.broadcast %cst_31 : f32 to vector<16x1xf32>
    %94 = arith.addf %90, %93 : vector<16x1xf32>
    %95 = math.rsqrt %94 : vector<16x1xf32>
    %96 = vector.broadcast %95 : vector<16x1xf32> to vector<16x32xf32>
    %97 = arith.mulf %92, %96 : vector<16x32xf32>
    %98 = vector.broadcast %78 : vector<1x32xf32> to vector<16x32xf32>
    %99 = arith.mulf %97, %98 : vector<16x32xf32>
    %100 = vector.broadcast %79 : vector<1x32xf32> to vector<16x32xf32>
    %101 = arith.addf %99, %100 : vector<16x32xf32>
    %102 = arith.addf %26, %101 : vector<16x32xf32>
    %c0_32 = arith.constant 0 : index
    %c0_33 = arith.constant 0 : index
    %103 = vector.load %arg8[%c0_32, %c0_33] : memref<32x64xf32, #tpu.memory_space<vmem>>, vector<32x64xf32>
    %cst_34 = arith.constant dense<0.000000e+00> : vector<16x64xf32>
    %104 = tpu.matmul %102, %103, %cst_34 {dimension_numbers = #tpu.dot_dimension_numbers<[1], [0], [0], [1], [0, 0, 1, 1], [], []>} : vector<16x32xf32>, vector<32x64xf32>, vector<16x64xf32> -> vector<16x64xf32>
    %c0_35 = arith.constant 0 : index
    %c0_36 = arith.constant 0 : index
    %105 = vector.load %arg9[%c0_35, %c0_36] : memref<1x64xf32, #tpu.memory_space<vmem>>, vector<1x64xf32>
    %106 = vector.broadcast %105 : vector<1x64xf32> to vector<16x64xf32>
    %107 = arith.addf %104, %106 : vector<16x64xf32>
    %cst_37 = arith.constant 5.000000e-01 : f32
    %108 = vector.broadcast %cst_37 : f32 to vector<16x64xf32>
    %109 = arith.mulf %108, %107 : vector<16x64xf32>
    %cst_38 = arith.constant 0.707106769 : f32
    %110 = vector.broadcast %cst_38 : f32 to vector<16x64xf32>
    %111 = arith.mulf %107, %110 : vector<16x64xf32>
    %cst_39 = arith.constant 0.000000e+00 : f32
    %112 = vector.broadcast %cst_39 : f32 to vector<16x64xf32>
    %113 = arith.cmpf olt, %111, %112 : vector<16x64xf32>
    %cst_40 = arith.constant -1.000000e+00 : f32
    %cst_41 = arith.constant 1.000000e+00 : f32
    %114 = vector.broadcast %cst_40 : f32 to vector<16x64xf32>
    %115 = vector.broadcast %cst_41 : f32 to vector<16x64xf32>
    %116 = arith.select %113, %114, %115 : vector<16x64xi1>, vector<16x64xf32>
    %117 = math.absf %111 : vector<16x64xf32>
    %cst_42 = arith.constant 0.327591091 : f32
    %118 = vector.broadcast %cst_42 : f32 to vector<16x64xf32>
    %119 = arith.mulf %118, %117 : vector<16x64xf32>
    %cst_43 = arith.constant 1.000000e+00 : f32
    %120 = vector.broadcast %cst_43 : f32 to vector<16x64xf32>
    %121 = arith.addf %120, %119 : vector<16x64xf32>
    %122 = tpu.reciprocal %121 {approx = true} : vector<16x64xf32> -> vector<16x64xf32>
    %cst_44 = arith.constant 1.06140542 : f32
    %123 = vector.broadcast %cst_44 : f32 to vector<16x64xf32>
    %124 = arith.mulf %123, %122 : vector<16x64xf32>
    %cst_45 = arith.constant -1.45315206 : f32
    %125 = vector.broadcast %cst_45 : f32 to vector<16x64xf32>
    %126 = arith.addf %124, %125 : vector<16x64xf32>
    %127 = arith.mulf %126, %122 : vector<16x64xf32>
    %cst_46 = arith.constant 1.42141378 : f32
    %128 = vector.broadcast %cst_46 : f32 to vector<16x64xf32>
    %129 = arith.addf %127, %128 : vector<16x64xf32>
    %130 = arith.mulf %129, %122 : vector<16x64xf32>
    %cst_47 = arith.constant -0.284496725 : f32
    %131 = vector.broadcast %cst_47 : f32 to vector<16x64xf32>
    %132 = arith.addf %130, %131 : vector<16x64xf32>
    %133 = arith.mulf %132, %122 : vector<16x64xf32>
    %cst_48 = arith.constant 0.254829586 : f32
    %134 = vector.broadcast %cst_48 : f32 to vector<16x64xf32>
    %135 = arith.addf %133, %134 : vector<16x64xf32>
    %136 = arith.mulf %135, %122 : vector<16x64xf32>
    %cst_49 = arith.constant 0.000000e+00 : f32
    %137 = vector.broadcast %cst_49 : f32 to vector<16x64xf32>
    %138 = arith.subf %137, %117 : vector<16x64xf32>
    %139 = arith.mulf %138, %117 : vector<16x64xf32>
    %140 = math.exp %139 : vector<16x64xf32>
    %141 = arith.mulf %136, %140 : vector<16x64xf32>
    %cst_50 = arith.constant 1.000000e+00 : f32
    %142 = vector.broadcast %cst_50 : f32 to vector<16x64xf32>
    %143 = arith.subf %142, %141 : vector<16x64xf32>
    %144 = arith.mulf %116, %143 : vector<16x64xf32>
    %cst_51 = arith.constant 1.000000e+00 : f32
    %145 = vector.broadcast %cst_51 : f32 to vector<16x64xf32>
    %146 = arith.addf %145, %144 : vector<16x64xf32>
    %147 = arith.mulf %109, %146 : vector<16x64xf32>
    %c0_52 = arith.constant 0 : index
    %c0_53 = arith.constant 0 : index
    %148 = vector.load %arg10[%c0_52, %c0_53] : memref<64x32xf32, #tpu.memory_space<vmem>>, vector<64x32xf32>
    %cst_54 = arith.constant dense<0.000000e+00> : vector<16x32xf32>
    %149 = tpu.matmul %147, %148, %cst_54 {dimension_numbers = #tpu.dot_dimension_numbers<[1], [0], [0], [1], [0, 0, 1, 1], [], []>} : vector<16x64xf32>, vector<64x32xf32>, vector<16x32xf32> -> vector<16x32xf32>
    %150 = vector.extract_strided_slice %1 {offsets = [21, 0], sizes = [1, 32], strides = [1, 1]} : vector<24x32xf32> to vector<1x32xf32>
    %151 = vector.broadcast %150 : vector<1x32xf32> to vector<16x32xf32>
    %152 = arith.addf %149, %151 : vector<16x32xf32>
    %153 = vector.extract_strided_slice %1 {offsets = [22, 0], sizes = [1, 32], strides = [1, 1]} : vector<24x32xf32> to vector<1x32xf32>
    %154 = vector.extract_strided_slice %1 {offsets = [23, 0], sizes = [1, 32], strides = [1, 1]} : vector<24x32xf32> to vector<1x32xf32>
    %cst_55 = arith.constant dense<0.000000e+00> : vector<16xf32>
    %155 = vector.multi_reduction <add>, %152, %cst_55 [1] : vector<16x32xf32> to vector<16xf32>
    %156 = vector.shape_cast %155 : vector<16xf32> to vector<16x1xf32>
    %cst_56 = arith.constant 3.200000e+01 : f32
    %157 = vector.broadcast %cst_56 : f32 to vector<16x1xf32>
    %158 = arith.divf %156, %157 : vector<16x1xf32>
    %159 = vector.broadcast %158 : vector<16x1xf32> to vector<16x32xf32>
    %160 = arith.subf %152, %159 : vector<16x32xf32>
    %161 = arith.mulf %160, %160 : vector<16x32xf32>
    %cst_57 = arith.constant dense<0.000000e+00> : vector<16xf32>
    %162 = vector.multi_reduction <add>, %161, %cst_57 [1] : vector<16x32xf32> to vector<16xf32>
    %163 = vector.shape_cast %162 : vector<16xf32> to vector<16x1xf32>
    %cst_58 = arith.constant 3.200000e+01 : f32
    %164 = vector.broadcast %cst_58 : f32 to vector<16x1xf32>
    %165 = arith.divf %163, %164 : vector<16x1xf32>
    %166 = vector.broadcast %158 : vector<16x1xf32> to vector<16x32xf32>
    %167 = arith.subf %152, %166 : vector<16x32xf32>
    %cst_59 = arith.constant 9.99999974E-6 : f32
    %168 = vector.broadcast %cst_59 : f32 to vector<16x1xf32>
    %169 = arith.addf %165, %168 : vector<16x1xf32>
    %170 = math.rsqrt %169 : vector<16x1xf32>
    %171 = vector.broadcast %170 : vector<16x1xf32> to vector<16x32xf32>
    %172 = arith.mulf %167, %171 : vector<16x32xf32>
    %173 = vector.broadcast %153 : vector<1x32xf32> to vector<16x32xf32>
    %174 = arith.mulf %172, %173 : vector<16x32xf32>
    %175 = vector.broadcast %154 : vector<1x32xf32> to vector<16x32xf32>
    %176 = arith.addf %174, %175 : vector<16x32xf32>
    %177 = arith.addf %176, %102 : vector<16x32xf32>
    %c0_60 = arith.constant 0 : index
    %c0_61 = arith.constant 0 : index
    %178 = vector.load %arg11[%c0_60, %c0_61] : memref<16x32xf32, #tpu.memory_space<vmem>>, vector<16x32xf32>
    tpu.vector_store %arg11[%c0_60, %c0_61], %177 {strides = array<i32>} : memref<16x32xf32, #tpu.memory_space<vmem>>, vector<16x32xf32>,
    return
  }
  func.func @transform_0(%arg0: i32) -> (i32, i32) {
    %c0_i32 = arith.constant 0 : i32
    %c0_i32_0 = arith.constant 0 : i32
    %c0_i32_1 = arith.constant 0 : i32
    return %c0_i32, %c0_i32_0 : i32, i32
  }
  func.func @transform_1(%arg0: i32) -> (i32, i32) {
    %c0_i32 = arith.constant 0 : i32
    %c0_i32_0 = arith.constant 0 : i32
    %c0_i32_1 = arith.constant 0 : i32
    return %c0_i32, %c0_i32_0 : i32, i32
  }
  func.func @transform_2(%arg0: i32) -> (i32, i32) {
    %c0_i32 = arith.constant 0 : i32
    %c0_i32_0 = arith.constant 0 : i32
    %c0_i32_1 = arith.constant 0 : i32
    return %c0_i32, %c0_i32_0 : i32, i32
  }
  func.func @transform_3(%arg0: i32) -> (i32, i32) {
    %c0_i32 = arith.constant 0 : i32
    %c0_i32_0 = arith.constant 0 : i32
    %c0_i32_1 = arith.constant 0 : i32
    return %c0_i32, %c0_i32_0 : i32, i32
  }
  func.func @transform_4(%arg0: i32) -> (i32, i32) {
    %c0_i32 = arith.constant 0 : i32
    %c0_i32_0 = arith.constant 0 : i32
    %c0_i32_1 = arith.constant 0 : i32
    return %c0_i32, %c0_i32_0 : i32, i32
  }
  func.func @transform_5(%arg0: i32) -> (i32, i32) {
    %c0_i32 = arith.constant 0 : i32
    %c0_i32_0 = arith.constant 0 : i32
    %c0_i32_1 = arith.constant 0 : i32
    return %c0_i32, %c0_i32_0 : i32, i32
  }
  func.func @transform_6(%arg0: i32) -> (i32, i32) {
    %c0_i32 = arith.constant 0 : i32
    %c0_i32_0 = arith.constant 0 : i32
    %c0_i32_1 = arith.constant 0 : i32
    return %c0_i32, %c0_i32_0 : i32, i32
  }
  func.func @transform_7(%arg0: i32) -> (i32, i32) {
    %c0_i32 = arith.constant 0 : i32
    %c0_i32_0 = arith.constant 0 : i32
    %c0_i32_1 = arith.constant 0 : i32
    return %c0_i32, %c0_i32_0 : i32, i32
  }
  func.func @transform_8(%arg0: i32) -> (i32, i32) {
    %c0_i32 = arith.constant 0 : i32
    %c0_i32_0 = arith.constant 0 : i32
    %c0_i32_1 = arith.constant 0 : i32
    return %c0_i32, %c0_i32_0 : i32, i32
  }
  func.func @transform_9(%arg0: i32) -> (i32, i32) {
    %c0_i32 = arith.constant 0 : i32
    %c0_i32_0 = arith.constant 0 : i32
    %c0_i32_1 = arith.constant 0 : i32
    return %c0_i32, %c0_i32_0 : i32, i32
  }
  func.func @transform_10(%arg0: i32) -> (i32, i32) {
    %c0_i32 = arith.constant 0 : i32
    %c0_i32_0 = arith.constant 0 : i32
    %c0_i32_1 = arith.constant 0 : i32
    return %c0_i32, %c0_i32_0 : i32, i32
  }
}

</mosaic_0001>

<llo_original>
// kernel: tpu_custom_call.1
$region0: #{tpu_custom_call.1}
  #allocation0 [shape = 'u32[]', space=smem, size = 0x4, offset = 0x4, fixed_abs, tag = 'smem constant byte address 0x4 - core index']
  #allocation1 [shape = 'u32[144,128]{1,0:T(1,128)}', space=vmem, size = 0x12000, scoped, tag = 'internal scratch']
  %s0 = inlined_call_operand.hbm [shape: f32[16,32], index: 0, kind: input, shape index: {}]
  %s1 = inlined_call_operand.hbm [shape: f32[24,32], index: 1, kind: input, shape index: {}]
  %s2 = inlined_call_operand.vmem [shape: f32[32,32], index: 2, kind: input, shape index: {}]
  %s3 = inlined_call_operand.vmem [shape: f32[32,32], index: 3, kind: input, shape index: {}]
  %s4 = inlined_call_operand.vmem [shape: f32[32,96], index: 4, kind: input, shape index: {}]
  %s5 = inlined_call_operand.vmem [shape: f32[1,96], index: 5, kind: input, shape index: {}]
  %s6 = inlined_call_operand.hbm [shape: f32[32,32], index: 6, kind: input, shape index: {}]
  %s7 = inlined_call_operand.hbm [shape: f32[32,64], index: 7, kind: input, shape index: {}]
  %s8 = inlined_call_operand.vmem [shape: f32[1,64], index: 8, kind: input, shape index: {}]
  %s9 = inlined_call_operand.vmem [shape: f32[64,32], index: 9, kind: input, shape index: {}]
  %s10 = inlined_call_operand.hbm [shape: f32[16,32], index: 10, kind: output, shape index: {}]
  %s11 = sld [smem:[#allocation0]]
  $region66: #{tpu_custom_call.1} parent=0
    _
  %s13 = ssub.s32 1, %s11
  %s14 = scalar_select 0, %s13, %s11
  $region1: #{tpu_custom_call.1} parent=0
    #allocation2 [shape = 'u8[8192]{0}', space=vmem, size = 0x2000, scoped, tag = 'input window, operand 0, single buffered']
    #allocation3 [shape = 's32[1]{0}', space=sflag, size = 0x4, scoped, tag = 'scoped memory for tpu_custom_call.1']
    #allocation4 [shape = 's32[1]{0}', space=sflag, size = 0x4, scoped, tag = 'scoped memory for tpu_custom_call.1']
    #allocation5 [shape = 'u8[12288]{0}', space=vmem, size = 0x3000, scoped, tag = 'input window, operand 1, single buffered']
    #allocation6 [shape = 's32[1]{0}', space=sflag, size = 0x4, scoped, tag = 'scoped memory for tpu_custom_call.1']
    #allocation7 [shape = 'u8[16384]{0}', space=vmem, size = 0x4000, scoped, tag = 'input window, operand 6, single buffered']
    #allocation8 [shape = 'u8[16384]{0}', space=vmem, size = 0x4000, scoped, tag = 'input window, operand 7, single buffered']
    #allocation9 [shape = 's32[1]{0}', space=sflag, size = 0x4, scoped, tag = 'scoped memory for tpu_custom_call.1']
    #allocation10 [shape = 'u8[8192]{0}', space=vmem, size = 0x2000, scoped, tag = 'output window, operand 0, single buffered']
    %15 = vsyncpa [#allocation3], 0
    %16 = vsyncpa [#allocation6], 0
    %17 = vsyncpa [#allocation9], 0
    %18 = vsyncpa [#allocation4], 0
    // Predicated region
    $region2: #{tpu_custom_call.1} parent=1 // pred_check
      _
    $region3: #{tpu_custom_call.1} parent=1 // pred_check_branch
      %20 = sbr.rel (0) target = $region5
    $region4: #{tpu_custom_call.1} parent=1 // pred_region
      %s22 = ssub.s32 256, 256
      %23 = vsyncadd [#allocation3], %s22
      %s24 = sshll.u32 [#allocation2], 4
      %s25 = int_to_ptr.vmem [resolvable:$true] %s24
      %30 = dma.hbm_to_vmem [thread:$0]  %s0, 256, %s25, [#allocation3], 128, 128, 8
    $region5: #{tpu_custom_call.1} parent=1 // pred_fallthru
      _
    // Predicated region
    $region6: #{tpu_custom_call.1} parent=1 // pred_check
      _
    $region7: #{tpu_custom_call.1} parent=1 // pred_check_branch
      %32 = sbr.rel (0) target = $region9
    $region8: #{tpu_custom_call.1} parent=1 // pred_region
      %s34 = ssub.s32 384, 384
      %35 = vsyncadd [#allocation6], %s34
      %s36 = sshll.u32 [#allocation5], 4
      %s37 = int_to_ptr.vmem [resolvable:$true] %s36
      %42 = dma.hbm_to_vmem [thread:$0]  %s1, 384, %s37, [#allocation6], 128, 128, 8
    $region9: #{tpu_custom_call.1} parent=1 // pred_fallthru
      _
    // Predicated region
    $region10: #{tpu_custom_call.1} parent=1 // pred_check
      _
    $region11: #{tpu_custom_call.1} parent=1 // pred_check_branch
      %44 = sbr.rel (0) target = $region13
    $region12: #{tpu_custom_call.1} parent=1 // pred_region
      _
    $region13: #{tpu_custom_call.1} parent=1 // pred_fallthru
      _
    // Predicated region
    $region14: #{tpu_custom_call.1} parent=1 // pred_check
      _
    $region15: #{tpu_custom_call.1} parent=1 // pred_check_branch
      %46 = sbr.rel (0) target = $region17
    $region16: #{tpu_custom_call.1} parent=1 // pred_region
      _
    $region17: #{tpu_custom_call.1} parent=1 // pred_fallthru
      _
    // Predicated region
    $region18: #{tpu_custom_call.1} parent=1 // pred_check
      _
    $region19: #{tpu_custom_call.1} parent=1 // pred_check_branch
      %48 = sbr.rel (0) target = $region21
    $region20: #{tpu_custom_call.1} parent=1 // pred_region
      _
    $region21: #{tpu_custom_call.1} parent=1 // pred_fallthru
      _
    // Predicated region
    $region22: #{tpu_custom_call.1} parent=1 // pred_check
      _
    $region23: #{tpu_custom_call.1} parent=1 // pred_check_branch
      %50 = sbr.rel (0) target = $region25
    $region24: #{tpu_custom_call.1} parent=1 // pred_region
      _
    $region25: #{tpu_custom_call.1} parent=1 // pred_fallthru
      _
    // Predicated region
    $region26: #{tpu_custom_call.1} parent=1 // pred_check
      _
    $region27: #{tpu_custom_call.1} parent=1 // pred_check_branch
      %52 = sbr.rel (0) target = $region29
    $region28: #{tpu_custom_call.1} parent=1 // pred_region
      %s54 = ssub.s32 512, 512
      %55 = vsyncadd [#allocation6], %s54
      %s56 = sshll.u32 [#allocation7], 4
      %s57 = int_to_ptr.vmem [resolvable:$true] %s56
      %62 = dma.hbm_to_vmem [thread:$0]  %s6, 512, %s57, [#allocation6], 128, 128, 8
    $region29: #{tpu_custom_call.1} parent=1 // pred_fallthru
      _
    // Predicated region
    $region30: #{tpu_custom_call.1} parent=1 // pred_check
      _
    $region31: #{tpu_custom_call.1} parent=1 // pred_check_branch
      %64 = sbr.rel (0) target = $region33
    $region32: #{tpu_custom_call.1} parent=1 // pred_region
      %s66 = ssub.s32 512, 512
      %67 = vsyncadd [#allocation9], %s66
      %s68 = sshll.u32 [#allocation8], 4
      %s69 = int_to_ptr.vmem [resolvable:$true] %s68
      %74 = dma.hbm_to_vmem [thread:$0]  %s7, 512, %s69, [#allocation9], 128, 128, 8
    $region33: #{tpu_custom_call.1} parent=1 // pred_fallthru
      _
    // Predicated region
    $region34: #{tpu_custom_call.1} parent=1 // pred_check
      _
    $region35: #{tpu_custom_call.1} parent=1 // pred_check_branch
      %76 = sbr.rel (0) target = $region37
    $region36: #{tpu_custom_call.1} parent=1 // pred_region
      _
    $region37: #{tpu_custom_call.1} parent=1 // pred_fallthru
      _
    // Predicated region
    $region38: #{tpu_custom_call.1} parent=1 // pred_check
      _
    $region39: #{tpu_custom_call.1} parent=1 // pred_check_branch
      %78 = sbr.rel (0) target = $region41
    $region40: #{tpu_custom_call.1} parent=1 // pred_region
      _
    $region41: #{tpu_custom_call.1} parent=1 // pred_fallthru
      _
    // Predicated region
    $region42: #{tpu_custom_call.1} parent=1 // pred_check
      _
    $region43: #{tpu_custom_call.1} parent=1 // pred_check_branch
      %80 = sbr.rel (0) target = $region45
    $region44: #{tpu_custom_call.1} parent=1 // pred_region
      %81 = dma.done [#allocation3], 256
    $region45: #{tpu_custom_call.1} parent=1 // pred_fallthru
      _
    // Predicated region
    $region46: #{tpu_custom_call.1} parent=1 // pred_check
      _
    $region47: #{tpu_custom_call.1} parent=1 // pred_check_branch
      %83 = sbr.rel (0) target = $region49
    $region48: #{tpu_custom_call.1} parent=1 // pred_region
      %84 = dma.done [#allocation6], 384
    $region49: #{tpu_custom_call.1} parent=1 // pred_fallthru
      _
    // Predicated region
    $region50: #{tpu_custom_call.1} parent=1 // pred_check
      _
    $region51: #{tpu_custom_call.1} parent=1 // pred_check_branch
      %86 = sbr.rel (0) target = $region53
    $region52: #{tpu_custom_call.1} parent=1 // pred_region
      %87 = dma.done [#allocation6], 512
    $region53: #{tpu_custom_call.1} parent=1 // pred_fallthru
      _
    // Predicated region
    $region54: #{tpu_custom_call.1} parent=1 // pred_check
      _
    $region55: #{tpu_custom_call.1} parent=1 // pred_check_branch
      %89 = sbr.rel (0) target = $region57
    $region56: #{tpu_custom_call.1} parent=1 // pred_region
      %90 = dma.done [#allocation9], 512
    $region57: #{tpu_custom_call.1} parent=1 // pred_fallthru
      _
    %v91 = vld [vmem:[#allocation2] sm:$0xff]
    %v92 = vld [vmem:[#allocation2 + $0x8] sm:$0xff]
    %v93 = vld [vmem:[#allocation5] sm:$0xff]
    %v94 = vld [vmem:[#allocation5 + $0x8] sm:$0xff]
    %v95 = vld [vmem:[#allocation5 + $0x10] sm:$0xff]
    %vm96 = vcmask 261120
    %v97 = vsel %vm96, %v91, 0.0
    %98 = vadd.xlane.f32.xlu0 %v97
    %v99 = vpop.xlane.xlu0 %98
    %v100 = vsel %vm96, %v92, 0.0
    %101 = vadd.xlane.f32.xlu0 %v100
    %v102 = vpop.xlane.xlu0 %101
    %v103 = vrcp.pop 32.0
    %v104 = vmul.f32 %v99, %v103
    %v105 = vmul.f32 %v102, %v103
    %v106 = vsub.f32 %v91, %v104
    %v107 = vsub.f32 %v92, %v105
    %v108 = vmul.f32 %v106, %v106
    %v109 = vmul.f32 %v107, %v107
    %v110 = vsel %vm96, %v108, 0.0
    %111 = vadd.xlane.f32.xlu0 %v110
    %v112 = vpop.xlane.xlu0 %111
    %v113 = vsel %vm96, %v109, 0.0
    %114 = vadd.xlane.f32.xlu0 %v113
    %v115 = vpop.xlane.xlu0 %114
    %v116 = vmul.f32 %v112, %v103
    %v117 = vmul.f32 %v115, %v103
    %v118 = vadd.f32 %v116, 1e-05
    %v119 = vadd.f32 %v117, 1e-05
    %v120 = vrsqrt.pop %v118
    %v121 = vrsqrt.pop %v119
    %v122 = vmul.f32 %v106, %v120
    %v123 = vmul.f32 %v107, %v121
    %v124 = vlaneseq
    %v125 = vshrl.u32 %v124, 7
    %v126 = vsub.s32 0, %v125
    %v127 = vrot.slane %v95, %v126
    %v128 = vmul.f32 %v122, %v127
    %v129 = vmul.f32 %v123, %v127
    %v130 = vlaneseq
    %v131 = vshrl.u32 %v130, 7
    %v132 = vsub.s32 1, %v131
    %v133 = vrot.slane %v95, %v132
    %v134 = vadd.f32 %v128, %v133
    %v135 = vadd.f32 %v129, %v133
    %v136 = vadd.f32 %v134, %v93
    %v137 = vadd.f32 %v135, %v94
    %v138 = vld [vmem:[%s4] sm:$0xff]
    %v139 = vld [vmem:[%s4 + $0x8] sm:$0xff]
    %v140 = vld [vmem:[%s4 + $0x10] sm:$0xff]
    %v141 = vld [vmem:[%s4 + $0x18] sm:$0xff]
    %v142 = vld [vmem:[%s5] sm:$0x1]
    %v144 = vlaneseq
    %v145 = vshrl.u32 %v144, 7
    %v146 = vsub.s32 0, %v145
    %v147 = vrot.slane %v142, %v146
    %v150 = vsel %vm96, %v136, 0
    %v153 = vsel %vm96, %v137, 0
    %155 = vmatprep.subr.mxu0 0.0
    %156 = vmatpush1.msra.mxu0 0.0
    %157 = vmatprep.subr.mxu0 0.0
    %158 = vmatpush1.msra.mxu0 0.0
    %159 = vmatprep.subr.mxu0 0.0
    %160 = vmatpush1.msra.mxu0 0.0
    %161 = vmatprep.subr.mxu0 0.0
    %162 = vmatpush1.msra.mxu0 0.0
    %163 = vmatprep.subr.mxu0 0.0
    %164 = vmatpush1.msra.mxu0 0.0
    %165 = vmatprep.subr.mxu0 0.0
    %166 = vmatpush1.msra.mxu0 0.0
    %167 = vmatprep.subr.mxu0 0.0
    %168 = vmatpush1.msra.mxu0 0.0
    %169 = vmatprep.subr.mxu0 0.0
    %170 = vmatpush1.msra.mxu0 0.0
    %171 = vmatprep.subr.mxu0 0.0
    %172 = vmatpush1.msra.mxu0 0.0
    %173 = vmatprep.subr.mxu0 0.0
    %174 = vmatpush1.msra.mxu0 0.0
    %175 = vmatprep.subr.mxu0 0.0
    %176 = vmatpush1.msra.mxu0 0.0
    %177 = vmatprep.subr.mxu0 0.0
    %178 = vmatpush1.msra.mxu0 0.0
    %179 = vmatprep.subr.mxu0 0.0
    %180 = vmatpush1.msra.mxu0 %v141
    %181 = vmatprep.subr.mxu0 0.0
    %182 = vmatpush1.msra.mxu0 %v140
    %183 = vmatprep.subr.mxu0 0.0
    %184 = vmatpush1.msra.mxu0 %v139
    %185 = vmatprep.subr.mxu0 0.0
    %186 = vmatpush1.msra.mxu0 %v138
    %187 = vmatprep.subr.mxu0 0.0
    %188 = vmatpush2.msra.mxu0 0.0
    %189 = vmatprep.subr.mxu0 0.0
    %190 = vmatpush2.msra.mxu0 0.0
    %191 = vmatprep.subr.mxu0 0.0
    %192 = vmatpush2.msra.mxu0 0.0
    %193 = vmatprep.subr.mxu0 0.0
    %194 = vmatpush2.msra.mxu0 0.0
    %195 = vmatprep.subr.mxu0 0.0
    %196 = vmatpush2.msra.mxu0 0.0
    %197 = vmatprep.subr.mxu0 0.0
    %198 = vmatpush2.msra.mxu0 0.0
    %199 = vmatprep.subr.mxu0 0.0
    %200 = vmatpush2.msra.mxu0 0.0
    %201 = vmatprep.subr.mxu0 0.0
    %202 = vmatpush2.msra.mxu0 0.0
    %203 = vmatprep.subr.mxu0 0.0
    %204 = vmatpush2.msra.mxu0 0.0
    %205 = vmatprep.subr.mxu0 0.0
    %206 = vmatpush2.msra.mxu0 0.0
    %207 = vmatprep.subr.mxu0 0.0
    %208 = vmatpush2.msra.mxu0 0.0
    %209 = vmatprep.subr.mxu0 0.0
    %210 = vmatpush2.msra.mxu0 0.0
    %211 = vmatprep.subr.mxu0 0.0
    %212 = vmatpush2.msra.mxu0 0.0
    %213 = vmatprep.subr.mxu0 0.0
    %214 = vmatpush2.msra.mxu0 0.0
    %215 = vmatprep.subr.mxu0 0.0
    %216 = vmatpush2.msra.mxu0 0.0
    %217 = vmatprep.subr.mxu0 0.0
    %218 = vmatpush2.msra.mxu0 0.0
    %219 = vmatprep.mubr.f32.mxu0 0.0
    %220 = vmatmul.mubr.f32.gmra.mxu0 %v150
    %v221 = vpop.f32.mrf.mxu0
    %v222 = vadd.f32 %v147, %v221
    %v223 = vpop.f32.mrf.mxu0
    %224 = vmatprep.mubr.f32.mxu0 0.0
    %225 = vmatmul.mubr.f32.gmra.mxu0 %v153
    %v226 = vpop.f32.mrf.mxu0
    %v227 = vadd.f32 %v147, %v226
    %v228 = vpop.f32.mrf.mxu0
    %229 = vdwg.mxu0
    %v230 = vld [vmem:[%s2] sm:$0xff]
    %v231 = vld [vmem:[%s2 + $0x8] sm:$0xff]
    %v232 = vld [vmem:[%s2 + $0x10] sm:$0xff]
    %v233 = vld [vmem:[%s2 + $0x18] sm:$0xff]
    %v234 = vld [vmem:[%s3] sm:$0xff]
    %v235 = vld [vmem:[%s3 + $0x8] sm:$0xff]
    %v236 = vld [vmem:[%s3 + $0x10] sm:$0xff]
    %v237 = vld [vmem:[%s3 + $0x18] sm:$0xff]
    %242 = vrot.lane.b32.xlu0 %v230, 32
    %v243 = vpop.permute.xlu0 %242
    %244 = vrot.lane.b32.xlu0 %v231, 32
    %v245 = vpop.permute.xlu0 %244
    %246 = vrot.lane.b32.xlu0 %v232, 32
    %v247 = vpop.permute.xlu0 %246
    %248 = vrot.lane.b32.xlu0 %v233, 32
    %v249 = vpop.permute.xlu0 %248
    %v254 = vmul.f32 %v222, %v243
    %v255 = vmul.f32 %v222, %v245
    %v256 = vmul.f32 %v222, %v247
    %v257 = vmul.f32 %v222, %v249
    %258 = vrot.lane.b32.xlu0 %v230, 64
    %v259 = vpop.permute.xlu0 %258
    %260 = vrot.lane.b32.xlu0 %v231, 64
    %v261 = vpop.permute.xlu0 %260
    %262 = vrot.lane.b32.xlu0 %v232, 64
    %v263 = vpop.permute.xlu0 %262
    %264 = vrot.lane.b32.xlu0 %v233, 64
    %v265 = vpop.permute.xlu0 %264
    %v270 = vmul.f32 %v222, %v259
    %v271 = vmul.f32 %v222, %v261
    %v272 = vmul.f32 %v222, %v263
    %v273 = vmul.f32 %v222, %v265
    %278 = vrot.lane.b32.xlu0 %v254, 96
    %v279 = vpop.permute.xlu0 %278
    %280 = vrot.lane.b32.xlu0 %v255, 96
    %v281 = vpop.permute.xlu0 %280
    %282 = vrot.lane.b32.xlu0 %v256, 96
    %v283 = vpop.permute.xlu0 %282
    %284 = vrot.lane.b32.xlu0 %v257, 96
    %v285 = vpop.permute.xlu0 %284
    %v287 = vsel %vm96, %v222, 0
    %v289 = vsel %vm96, %v279, 0
    %v291 = vsel %vm96, %v281, 0
    %v293 = vsel %vm96, %v283, 0
    %v295 = vsel %vm96, %v285, 0
    %297 = vmatprep.subr.mxu0 0.0
    %298 = vmatpush1.xpose.msra.mxu0 0.0
    %299 = vmatprep.subr.mxu0 0.0
    %300 = vmatpush1.xpose.msra.mxu0 0.0
    %301 = vmatprep.subr.mxu0 0.0
    %302 = vmatpush1.xpose.msra.mxu0 0.0
    %303 = vmatprep.subr.mxu0 0.0
    %304 = vmatpush1.xpose.msra.mxu0 0.0
    %305 = vmatprep.subr.mxu0 0.0
    %306 = vmatpush1.xpose.msra.mxu0 0.0
    %307 = vmatprep.subr.mxu0 0.0
    %308 = vmatpush1.xpose.msra.mxu0 0.0
    %309 = vmatprep.subr.mxu0 0.0
    %310 = vmatpush1.xpose.msra.mxu0 0.0
    %311 = vmatprep.subr.mxu0 0.0
    %312 = vmatpush1.xpose.msra.mxu0 0.0
    %313 = vmatprep.subr.mxu0 0.0
    %314 = vmatpush1.xpose.msra.mxu0 0.0
    %315 = vmatprep.subr.mxu0 0.0
    %316 = vmatpush1.xpose.msra.mxu0 0.0
    %317 = vmatprep.subr.mxu0 0.0
    %318 = vmatpush1.xpose.msra.mxu0 0.0
    %319 = vmatprep.subr.mxu0 0.0
    %320 = vmatpush1.xpose.msra.mxu0 0.0
    %321 = vmatprep.subr.mxu0 0.0
    %322 = vmatpush1.xpose.msra.mxu0 %v295
    %323 = vmatprep.subr.mxu0 0.0
    %324 = vmatpush1.xpose.msra.mxu0 %v293
    %325 = vmatprep.subr.mxu0 0.0
    %326 = vmatpush1.xpose.msra.mxu0 %v291
    %327 = vmatprep.subr.mxu0 0.0
    %328 = vmatpush1.xpose.msra.mxu0 %v289
    %329 = vmatprep.subr.mxu0 0.0
    %330 = vmatpush2.xpose.msra.mxu0 0.0
    %331 = vmatprep.subr.mxu0 0.0
    %332 = vmatpush2.xpose.msra.mxu0 0.0
    %333 = vmatprep.subr.mxu0 0.0
    %334 = vmatpush2.xpose.msra.mxu0 0.0
    %335 = vmatprep.subr.mxu0 0.0
    %336 = vmatpush2.xpose.msra.mxu0 0.0
    %337 = vmatprep.subr.mxu0 0.0
    %338 = vmatpush2.xpose.msra.mxu0 0.0
    %339 = vmatprep.subr.mxu0 0.0
    %340 = vmatpush2.xpose.msra.mxu0 0.0
    %341 = vmatprep.subr.mxu0 0.0
    %342 = vmatpush2.xpose.msra.mxu0 0.0
    %343 = vmatprep.subr.mxu0 0.0
    %344 = vmatpush2.xpose.msra.mxu0 0.0
    %345 = vmatprep.subr.mxu0 0.0
    %346 = vmatpush2.xpose.msra.mxu0 0.0
    %347 = vmatprep.subr.mxu0 0.0
    %348 = vmatpush2.xpose.msra.mxu0 0.0
    %349 = vmatprep.subr.mxu0 0.0
    %350 = vmatpush2.xpose.msra.mxu0 0.0
    %351 = vmatprep.subr.mxu0 0.0
    %352 = vmatpush2.xpose.msra.mxu0 0.0
    %353 = vmatprep.subr.mxu0 0.0
    %354 = vmatpush2.xpose.msra.mxu0 0.0
    %355 = vmatprep.subr.mxu0 0.0
    %356 = vmatpush2.xpose.msra.mxu0 0.0
    %357 = vmatprep.subr.mxu0 0.0
    %358 = vmatpush2.xpose.msra.mxu0 0.0
    %359 = vmatprep.subr.mxu0 0.0
    %360 = vmatpush2.xpose.msra.mxu0 0.0
    %361 = vmatprep.mubr.f32.mxu0 0.0
    %362 = vmatmul.mubr.f32.gmra.mxu0 %v287
    %v363 = vpop.f32.mrf.mxu0
    %v364 = vadd.f32 0.0, %v363
    %v365 = vpop.f32.mrf.mxu0
    %366 = vdwg.mxu0
    %v367 = vsel %vm96, %v364, -inf
    %368 = vmax.xlane.f32.xlu0 %v367
    %v369 = vpop.xlane.xlu0 %368
    %v370 = vsub.f32 %v364, %v369
    %v371 = vmul.f32 %v370, 1.442695
    %v372 = vpow.pop %v371
    %v374 = vsel %vm96, %v372, 0
    %376 = vmatprep.subr.mxu0 0.0
    %377 = vmatpush1.msra.mxu0 0.0
    %378 = vmatprep.subr.mxu0 0.0
    %379 = vmatpush1.msra.mxu0 0.0
    %380 = vmatprep.subr.mxu0 0.0
    %381 = vmatpush1.msra.mxu0 0.0
    %382 = vmatprep.subr.mxu0 0.0
    %383 = vmatpush1.msra.mxu0 0.0
    %384 = vmatprep.subr.mxu0 0.0
    %385 = vmatpush1.msra.mxu0 0.0
    %386 = vmatprep.subr.mxu0 0.0
    %387 = vmatpush1.msra.mxu0 0.0
    %388 = vmatprep.subr.mxu0 0.0
    %389 = vmatpush1.msra.mxu0 0.0
    %390 = vmatprep.subr.mxu0 0.0
    %391 = vmatpush1.msra.mxu0 0.0
    %392 = vmatprep.subr.mxu0 0.0
    %393 = vmatpush1.msra.mxu0 0.0
    %394 = vmatprep.subr.mxu0 0.0
    %395 = vmatpush1.msra.mxu0 0.0
    %396 = vmatprep.subr.mxu0 0.0
    %397 = vmatpush1.msra.mxu0 0.0
    %398 = vmatprep.subr.mxu0 0.0
    %399 = vmatpush1.msra.mxu0 0.0
    %400 = vmatprep.subr.mxu0 0.0
    %401 = vmatpush1.msra.mxu0 %v237
    %402 = vmatprep.subr.mxu0 0.0
    %403 = vmatpush1.msra.mxu0 %v236
    %404 = vmatprep.subr.mxu0 0.0
    %405 = vmatpush1.msra.mxu0 %v235
    %406 = vmatprep.subr.mxu0 0.0
    %407 = vmatpush1.msra.mxu0 %v234
    %408 = vmatprep.subr.mxu0 0.0
    %409 = vmatpush2.msra.mxu0 0.0
    %410 = vmatprep.subr.mxu0 0.0
    %411 = vmatpush2.msra.mxu0 0.0
    %412 = vmatprep.subr.mxu0 0.0
    %413 = vmatpush2.msra.mxu0 0.0
    %414 = vmatprep.subr.mxu0 0.0
    %415 = vmatpush2.msra.mxu0 0.0
    %416 = vmatprep.subr.mxu0 0.0
    %417 = vmatpush2.msra.mxu0 0.0
    %418 = vmatprep.subr.mxu0 0.0
    %419 = vmatpush2.msra.mxu0 0.0
    %420 = vmatprep.subr.mxu0 0.0
    %421 = vmatpush2.msra.mxu0 0.0
    %422 = vmatprep.subr.mxu0 0.0
    %423 = vmatpush2.msra.mxu0 0.0
    %424 = vmatprep.subr.mxu0 0.0
    %425 = vmatpush2.msra.mxu0 0.0
    %426 = vmatprep.subr.mxu0 0.0
    %427 = vmatpush2.msra.mxu0 0.0
    %428 = vmatprep.subr.mxu0 0.0
    %429 = vmatpush2.msra.mxu0 0.0
    %430 = vmatprep.subr.mxu0 0.0
    %431 = vmatpush2.msra.mxu0 0.0
    %432 = vmatprep.subr.mxu0 0.0
    %433 = vmatpush2.msra.mxu0 0.0
    %434 = vmatprep.subr.mxu0 0.0
    %435 = vmatpush2.msra.mxu0 0.0
    %436 = vmatprep.subr.mxu0 0.0
    %437 = vmatpush2.msra.mxu0 0.0
    %438 = vmatprep.subr.mxu0 0.0
    %439 = vmatpush2.msra.mxu0 0.0
    %440 = vmatprep.mubr.f32.mxu0 0.0
    %441 = vmatmul.mubr.f32.gmra.mxu0 %v374
    %v442 = vpop.f32.mrf.mxu0
    %v443 = vadd.f32 0.0, %v442
    %v444 = vpop.f32.mrf.mxu0
    %445 = vdwg.mxu0
    %v446 = vrcp.pop %v443
    %v447 = vmul.f32 %v372, %v446
    %452 = vrot.lane.b32.xlu0 %v270, 64
    %v453 = vpop.permute.xlu0 %452
    %454 = vrot.lane.b32.xlu0 %v271, 64
    %v455 = vpop.permute.xlu0 %454
    %456 = vrot.lane.b32.xlu0 %v272, 64
    %v457 = vpop.permute.xlu0 %456
    %458 = vrot.lane.b32.xlu0 %v273, 64
    %v459 = vpop.permute.xlu0 %458
    %v465 = vsel %vm96, %v447, 0
    %467 = vmatprep.subr.mxu0 0.0
    %468 = vmatpush1.msra.mxu0 0.0
    %469 = vmatprep.subr.mxu0 0.0
    %470 = vmatpush1.msra.mxu0 0.0
    %471 = vmatprep.subr.mxu0 0.0
    %472 = vmatpush1.msra.mxu0 0.0
    %473 = vmatprep.subr.mxu0 0.0
    %474 = vmatpush1.msra.mxu0 0.0
    %475 = vmatprep.subr.mxu0 0.0
    %476 = vmatpush1.msra.mxu0 0.0
    %477 = vmatprep.subr.mxu0 0.0
    %478 = vmatpush1.msra.mxu0 0.0
    %479 = vmatprep.subr.mxu0 0.0
    %480 = vmatpush1.msra.mxu0 0.0
    %481 = vmatprep.subr.mxu0 0.0
    %482 = vmatpush1.msra.mxu0 0.0
    %483 = vmatprep.subr.mxu0 0.0
    %484 = vmatpush1.msra.mxu0 0.0
    %485 = vmatprep.subr.mxu0 0.0
    %486 = vmatpush1.msra.mxu0 0.0
    %487 = vmatprep.subr.mxu0 0.0
    %488 = vmatpush1.msra.mxu0 0.0
    %489 = vmatprep.subr.mxu0 0.0
    %490 = vmatpush1.msra.mxu0 0.0
    %491 = vmatprep.subr.mxu0 0.0
    %492 = vmatpush1.msra.mxu0 %v459
    %493 = vmatprep.subr.mxu0 0.0
    %494 = vmatpush1.msra.mxu0 %v457
    %495 = vmatprep.subr.mxu0 0.0
    %496 = vmatpush1.msra.mxu0 %v455
    %497 = vmatprep.subr.mxu0 0.0
    %498 = vmatpush1.msra.mxu0 %v453
    %499 = vmatprep.subr.mxu0 0.0
    %500 = vmatpush2.msra.mxu0 0.0
    %501 = vmatprep.subr.mxu0 0.0
    %502 = vmatpush2.msra.mxu0 0.0
    %503 = vmatprep.subr.mxu0 0.0
    %504 = vmatpush2.msra.mxu0 0.0
    %505 = vmatprep.subr.mxu0 0.0
    %506 = vmatpush2.msra.mxu0 0.0
    %507 = vmatprep.subr.mxu0 0.0
    %508 = vmatpush2.msra.mxu0 0.0
    %509 = vmatprep.subr.mxu0 0.0
    %510 = vmatpush2.msra.mxu0 0.0
    %511 = vmatprep.subr.mxu0 0.0
    %512 = vmatpush2.msra.mxu0 0.0
    %513 = vmatprep.subr.mxu0 0.0
    %514 = vmatpush2.msra.mxu0 0.0
    %515 = vmatprep.subr.mxu0 0.0
    %516 = vmatpush2.msra.mxu0 0.0
    %517 = vmatprep.subr.mxu0 0.0
    %518 = vmatpush2.msra.mxu0 0.0
    %519 = vmatprep.subr.mxu0 0.0
    %520 = vmatpush2.msra.mxu0 0.0
    %521 = vmatprep.subr.mxu0 0.0
    %522 = vmatpush2.msra.mxu0 0.0
    %523 = vmatprep.subr.mxu0 0.0
    %524 = vmatpush2.msra.mxu0 0.0
    %525 = vmatprep.subr.mxu0 0.0
    %526 = vmatpush2.msra.mxu0 0.0
    %527 = vmatprep.subr.mxu0 0.0
    %528 = vmatpush2.msra.mxu0 0.0
    %529 = vmatprep.subr.mxu0 0.0
    %530 = vmatpush2.msra.mxu0 0.0
    %531 = vmatprep.mubr.f32.mxu0 0.0
    %532 = vmatmul.mubr.f32.gmra.mxu0 %v465
    %v533 = vpop.f32.mrf.mxu0
    %v534 = vadd.f32 0.0, %v533
    %v535 = vpop.f32.mrf.mxu0
    %536 = vdwg.mxu0
    %v537 = vmul.f32 %v227, %v243
    %v538 = vmul.f32 %v227, %v245
    %v539 = vmul.f32 %v227, %v247
    %v540 = vmul.f32 %v227, %v249
    %v541 = vmul.f32 %v227, %v259
    %v542 = vmul.f32 %v227, %v261
    %v543 = vmul.f32 %v227, %v263
    %v544 = vmul.f32 %v227, %v265
    %549 = vrot.lane.b32.xlu0 %v537, 96
    %v550 = vpop.permute.xlu0 %549
    %551 = vrot.lane.b32.xlu0 %v538, 96
    %v552 = vpop.permute.xlu0 %551
    %553 = vrot.lane.b32.xlu0 %v539, 96
    %v554 = vpop.permute.xlu0 %553
    %555 = vrot.lane.b32.xlu0 %v540, 96
    %v556 = vpop.permute.xlu0 %555
    %v558 = vsel %vm96, %v227, 0
    %v560 = vsel %vm96, %v550, 0
    %v562 = vsel %vm96, %v552, 0
    %v564 = vsel %vm96, %v554, 0
    %v566 = vsel %vm96, %v556, 0
    %568 = vmatprep.subr.mxu0 0.0
    %569 = vmatpush1.xpose.msra.mxu0 0.0
    %570 = vmatprep.subr.mxu0 0.0
    %571 = vmatpush1.xpose.msra.mxu0 0.0
    %572 = vmatprep.subr.mxu0 0.0
    %573 = vmatpush1.xpose.msra.mxu0 0.0
    %574 = vmatprep.subr.mxu0 0.0
    %575 = vmatpush1.xpose.msra.mxu0 0.0
    %576 = vmatprep.subr.mxu0 0.0
    %577 = vmatpush1.xpose.msra.mxu0 0.0
    %578 = vmatprep.subr.mxu0 0.0
    %579 = vmatpush1.xpose.msra.mxu0 0.0
    %580 = vmatprep.subr.mxu0 0.0
    %581 = vmatpush1.xpose.msra.mxu0 0.0
    %582 = vmatprep.subr.mxu0 0.0
    %583 = vmatpush1.xpose.msra.mxu0 0.0
    %584 = vmatprep.subr.mxu0 0.0
    %585 = vmatpush1.xpose.msra.mxu0 0.0
    %586 = vmatprep.subr.mxu0 0.0
    %587 = vmatpush1.xpose.msra.mxu0 0.0
    %588 = vmatprep.subr.mxu0 0.0
    %589 = vmatpush1.xpose.msra.mxu0 0.0
    %590 = vmatprep.subr.mxu0 0.0
    %591 = vmatpush1.xpose.msra.mxu0 0.0
    %592 = vmatprep.subr.mxu0 0.0
    %593 = vmatpush1.xpose.msra.mxu0 %v566
    %594 = vmatprep.subr.mxu0 0.0
    %595 = vmatpush1.xpose.msra.mxu0 %v564
    %596 = vmatprep.subr.mxu0 0.0
    %597 = vmatpush1.xpose.msra.mxu0 %v562
    %598 = vmatprep.subr.mxu0 0.0
    %599 = vmatpush1.xpose.msra.mxu0 %v560
    %600 = vmatprep.subr.mxu0 0.0
    %601 = vmatpush2.xpose.msra.mxu0 0.0
    %602 = vmatprep.subr.mxu0 0.0
    %603 = vmatpush2.xpose.msra.mxu0 0.0
    %604 = vmatprep.subr.mxu0 0.0
    %605 = vmatpush2.xpose.msra.mxu0 0.0
    %606 = vmatprep.subr.mxu0 0.0
    %607 = vmatpush2.xpose.msra.mxu0 0.0
    %608 = vmatprep.subr.mxu0 0.0
    %609 = vmatpush2.xpose.msra.mxu0 0.0
    %610 = vmatprep.subr.mxu0 0.0
    %611 = vmatpush2.xpose.msra.mxu0 0.0
    %612 = vmatprep.subr.mxu0 0.0
    %613 = vmatpush2.xpose.msra.mxu0 0.0
    %614 = vmatprep.subr.mxu0 0.0
    %615 = vmatpush2.xpose.msra.mxu0 0.0
    %616 = vmatprep.subr.mxu0 0.0
    %617 = vmatpush2.xpose.msra.mxu0 0.0
    %618 = vmatprep.subr.mxu0 0.0
    %619 = vmatpush2.xpose.msra.mxu0 0.0
    %620 = vmatprep.subr.mxu0 0.0
    %621 = vmatpush2.xpose.msra.mxu0 0.0
    %622 = vmatprep.subr.mxu0 0.0
    %623 = vmatpush2.xpose.msra.mxu0 0.0
    %624 = vmatprep.subr.mxu0 0.0
    %625 = vmatpush2.xpose.msra.mxu0 0.0
    %626 = vmatprep.subr.mxu0 0.0
    %627 = vmatpush2.xpose.msra.mxu0 0.0
    %628 = vmatprep.subr.mxu0 0.0
    %629 = vmatpush2.xpose.msra.mxu0 0.0
    %630 = vmatprep.subr.mxu0 0.0
    %631 = vmatpush2.xpose.msra.mxu0 0.0
    %632 = vmatprep.mubr.f32.mxu0 0.0
    %633 = vmatmul.mubr.f32.gmra.mxu0 %v558
    %v634 = vpop.f32.mrf.mxu0
    %v635 = vadd.f32 0.0, %v634
    %v636 = vpop.f32.mrf.mxu0
    %637 = vdwg.mxu0
    %v638 = vsel %vm96, %v635, -inf
    %639 = vmax.xlane.f32.xlu0 %v638
    %v640 = vpop.xlane.xlu0 %639
    %v641 = vsub.f32 %v635, %v640
    %v642 = vmul.f32 %v641, 1.442695
    %v643 = vpow.pop %v642
    %v645 = vsel %vm96, %v643, 0
    %647 = vmatprep.subr.mxu0 0.0
    %648 = vmatpush1.msra.mxu0 0.0
    %649 = vmatprep.subr.mxu0 0.0
    %650 = vmatpush1.msra.mxu0 0.0
    %651 = vmatprep.subr.mxu0 0.0
    %652 = vmatpush1.msra.mxu0 0.0
    %653 = vmatprep.subr.mxu0 0.0
    %654 = vmatpush1.msra.mxu0 0.0
    %655 = vmatprep.subr.mxu0 0.0
    %656 = vmatpush1.msra.mxu0 0.0
    %657 = vmatprep.subr.mxu0 0.0
    %658 = vmatpush1.msra.mxu0 0.0
    %659 = vmatprep.subr.mxu0 0.0
    %660 = vmatpush1.msra.mxu0 0.0
    %661 = vmatprep.subr.mxu0 0.0
    %662 = vmatpush1.msra.mxu0 0.0
    %663 = vmatprep.subr.mxu0 0.0
    %664 = vmatpush1.msra.mxu0 0.0
    %665 = vmatprep.subr.mxu0 0.0
    %666 = vmatpush1.msra.mxu0 0.0
    %667 = vmatprep.subr.mxu0 0.0
    %668 = vmatpush1.msra.mxu0 0.0
    %669 = vmatprep.subr.mxu0 0.0
    %670 = vmatpush1.msra.mxu0 0.0
    %671 = vmatprep.subr.mxu0 0.0
    %672 = vmatpush1.msra.mxu0 %v237
    %673 = vmatprep.subr.mxu0 0.0
    %674 = vmatpush1.msra.mxu0 %v236
    %675 = vmatprep.subr.mxu0 0.0
    %676 = vmatpush1.msra.mxu0 %v235
    %677 = vmatprep.subr.mxu0 0.0
    %678 = vmatpush1.msra.mxu0 %v234
    %679 = vmatprep.subr.mxu0 0.0
    %680 = vmatpush2.msra.mxu0 0.0
    %681 = vmatprep.subr.mxu0 0.0
    %682 = vmatpush2.msra.mxu0 0.0
    %683 = vmatprep.subr.mxu0 0.0
    %684 = vmatpush2.msra.mxu0 0.0
    %685 = vmatprep.subr.mxu0 0.0
    %686 = vmatpush2.msra.mxu0 0.0
    %687 = vmatprep.subr.mxu0 0.0
    %688 = vmatpush2.msra.mxu0 0.0
    %689 = vmatprep.subr.mxu0 0.0
    %690 = vmatpush2.msra.mxu0 0.0
    %691 = vmatprep.subr.mxu0 0.0
    %692 = vmatpush2.msra.mxu0 0.0
    %693 = vmatprep.subr.mxu0 0.0
    %694 = vmatpush2.msra.mxu0 0.0
    %695 = vmatprep.subr.mxu0 0.0
    %696 = vmatpush2.msra.mxu0 0.0
    %697 = vmatprep.subr.mxu0 0.0
    %698 = vmatpush2.msra.mxu0 0.0
    %699 = vmatprep.subr.mxu0 0.0
    %700 = vmatpush2.msra.mxu0 0.0
    %701 = vmatprep.subr.mxu0 0.0
    %702 = vmatpush2.msra.mxu0 0.0
    %703 = vmatprep.subr.mxu0 0.0
    %704 = vmatpush2.msra.mxu0 0.0
    %705 = vmatprep.subr.mxu0 0.0
    %706 = vmatpush2.msra.mxu0 0.0
    %707 = vmatprep.subr.mxu0 0.0
    %708 = vmatpush2.msra.mxu0 0.0
    %709 = vmatprep.subr.mxu0 0.0
    %710 = vmatpush2.msra.mxu0 0.0
    %711 = vmatprep.mubr.f32.mxu0 0.0
    %712 = vmatmul.mubr.f32.gmra.mxu0 %v645
    %v713 = vpop.f32.mrf.mxu0
    %v714 = vadd.f32 0.0, %v713
    %v715 = vpop.f32.mrf.mxu0
    %716 = vdwg.mxu0
    %v717 = vrcp.pop %v714
    %v718 = vmul.f32 %v643, %v717
    %723 = vrot.lane.b32.xlu0 %v541, 64
    %v724 = vpop.permute.xlu0 %723
    %725 = vrot.lane.b32.xlu0 %v542, 64
    %v726 = vpop.permute.xlu0 %725
    %727 = vrot.lane.b32.xlu0 %v543, 64
    %v728 = vpop.permute.xlu0 %727
    %729 = vrot.lane.b32.xlu0 %v544, 64
    %v730 = vpop.permute.xlu0 %729
    %v736 = vsel %vm96, %v718, 0
    %738 = vmatprep.subr.mxu0 0.0
    %739 = vmatpush1.msra.mxu0 0.0
    %740 = vmatprep.subr.mxu0 0.0
    %741 = vmatpush1.msra.mxu0 0.0
    %742 = vmatprep.subr.mxu0 0.0
    %743 = vmatpush1.msra.mxu0 0.0
    %744 = vmatprep.subr.mxu0 0.0
    %745 = vmatpush1.msra.mxu0 0.0
    %746 = vmatprep.subr.mxu0 0.0
    %747 = vmatpush1.msra.mxu0 0.0
    %748 = vmatprep.subr.mxu0 0.0
    %749 = vmatpush1.msra.mxu0 0.0
    %750 = vmatprep.subr.mxu0 0.0
    %751 = vmatpush1.msra.mxu0 0.0
    %752 = vmatprep.subr.mxu0 0.0
    %753 = vmatpush1.msra.mxu0 0.0
    %754 = vmatprep.subr.mxu0 0.0
    %755 = vmatpush1.msra.mxu0 0.0
    %756 = vmatprep.subr.mxu0 0.0
    %757 = vmatpush1.msra.mxu0 0.0
    %758 = vmatprep.subr.mxu0 0.0
    %759 = vmatpush1.msra.mxu0 0.0
    %760 = vmatprep.subr.mxu0 0.0
    %761 = vmatpush1.msra.mxu0 0.0
    %762 = vmatprep.subr.mxu0 0.0
    %763 = vmatpush1.msra.mxu0 %v730
    %764 = vmatprep.subr.mxu0 0.0
    %765 = vmatpush1.msra.mxu0 %v728
    %766 = vmatprep.subr.mxu0 0.0
    %767 = vmatpush1.msra.mxu0 %v726
    %768 = vmatprep.subr.mxu0 0.0
    %769 = vmatpush1.msra.mxu0 %v724
    %770 = vmatprep.subr.mxu0 0.0
    %771 = vmatpush2.msra.mxu0 0.0
    %772 = vmatprep.subr.mxu0 0.0
    %773 = vmatpush2.msra.mxu0 0.0
    %774 = vmatprep.subr.mxu0 0.0
    %775 = vmatpush2.msra.mxu0 0.0
    %776 = vmatprep.subr.mxu0 0.0
    %777 = vmatpush2.msra.mxu0 0.0
    %778 = vmatprep.subr.mxu0 0.0
    %779 = vmatpush2.msra.mxu0 0.0
    %780 = vmatprep.subr.mxu0 0.0
    %781 = vmatpush2.msra.mxu0 0.0
    %782 = vmatprep.subr.mxu0 0.0
    %783 = vmatpush2.msra.mxu0 0.0
    %784 = vmatprep.subr.mxu0 0.0
    %785 = vmatpush2.msra.mxu0 0.0
    %786 = vmatprep.subr.mxu0 0.0
    %787 = vmatpush2.msra.mxu0 0.0
    %788 = vmatprep.subr.mxu0 0.0
    %789 = vmatpush2.msra.mxu0 0.0
    %790 = vmatprep.subr.mxu0 0.0
    %791 = vmatpush2.msra.mxu0 0.0
    %792 = vmatprep.subr.mxu0 0.0
    %793 = vmatpush2.msra.mxu0 0.0
    %794 = vmatprep.subr.mxu0 0.0
    %795 = vmatpush2.msra.mxu0 0.0
    %796 = vmatprep.subr.mxu0 0.0
    %797 = vmatpush2.msra.mxu0 0.0
    %798 = vmatprep.subr.mxu0 0.0
    %799 = vmatpush2.msra.mxu0 0.0
    %800 = vmatprep.subr.mxu0 0.0
    %801 = vmatpush2.msra.mxu0 0.0
    %802 = vmatprep.mubr.f32.mxu0 0.0
    %803 = vmatmul.mubr.f32.gmra.mxu0 %v736
    %v804 = vpop.f32.mrf.mxu0
    %v805 = vadd.f32 0.0, %v804
    %v806 = vpop.f32.mrf.mxu0
    %807 = vdwg.mxu0
    %v808 = vld [vmem:[#allocation7] sm:$0xff]
    %v809 = vld [vmem:[#allocation7 + $0x8] sm:$0xff]
    %v810 = vld [vmem:[#allocation7 + $0x10] sm:$0xff]
    %v811 = vld [vmem:[#allocation7 + $0x18] sm:$0xff]
    %v812 = vlaneseq
    %v813 = vshrl.u32 %v812, 7
    %v814 = vsub.s32 2, %v813
    %v815 = vrot.slane %v95, %v814
    %v817 = vsel %vm96, %v534, 0
    %v820 = vsel %vm96, %v805, 0
    %822 = vmatprep.subr.mxu0 0.0
    %823 = vmatpush1.msra.mxu0 0.0
    %824 = vmatprep.subr.mxu0 0.0
    %825 = vmatpush1.msra.mxu0 0.0
    %826 = vmatprep.subr.mxu0 0.0
    %827 = vmatpush1.msra.mxu0 0.0
    %828 = vmatprep.subr.mxu0 0.0
    %829 = vmatpush1.msra.mxu0 0.0
    %830 = vmatprep.subr.mxu0 0.0
    %831 = vmatpush1.msra.mxu0 0.0
    %832 = vmatprep.subr.mxu0 0.0
    %833 = vmatpush1.msra.mxu0 0.0
    %834 = vmatprep.subr.mxu0 0.0
    %835 = vmatpush1.msra.mxu0 0.0
    %836 = vmatprep.subr.mxu0 0.0
    %837 = vmatpush1.msra.mxu0 0.0
    %838 = vmatprep.subr.mxu0 0.0
    %839 = vmatpush1.msra.mxu0 0.0
    %840 = vmatprep.subr.mxu0 0.0
    %841 = vmatpush1.msra.mxu0 0.0
    %842 = vmatprep.subr.mxu0 0.0
    %843 = vmatpush1.msra.mxu0 0.0
    %844 = vmatprep.subr.mxu0 0.0
    %845 = vmatpush1.msra.mxu0 0.0
    %846 = vmatprep.subr.mxu0 0.0
    %847 = vmatpush1.msra.mxu0 %v811
    %848 = vmatprep.subr.mxu0 0.0
    %849 = vmatpush1.msra.mxu0 %v810
    %850 = vmatprep.subr.mxu0 0.0
    %851 = vmatpush1.msra.mxu0 %v809
    %852 = vmatprep.subr.mxu0 0.0
    %853 = vmatpush1.msra.mxu0 %v808
    %854 = vmatprep.subr.mxu0 0.0
    %855 = vmatpush2.msra.mxu0 0.0
    %856 = vmatprep.subr.mxu0 0.0
    %857 = vmatpush2.msra.mxu0 0.0
    %858 = vmatprep.subr.mxu0 0.0
    %859 = vmatpush2.msra.mxu0 0.0
    %860 = vmatprep.subr.mxu0 0.0
    %861 = vmatpush2.msra.mxu0 0.0
    %862 = vmatprep.subr.mxu0 0.0
    %863 = vmatpush2.msra.mxu0 0.0
    %864 = vmatprep.subr.mxu0 0.0
    %865 = vmatpush2.msra.mxu0 0.0
    %866 = vmatprep.subr.mxu0 0.0
    %867 = vmatpush2.msra.mxu0 0.0
    %868 = vmatprep.subr.mxu0 0.0
    %869 = vmatpush2.msra.mxu0 0.0
    %870 = vmatprep.subr.mxu0 0.0
    %871 = vmatpush2.msra.mxu0 0.0
    %872 = vmatprep.subr.mxu0 0.0
    %873 = vmatpush2.msra.mxu0 0.0
    %874 = vmatprep.subr.mxu0 0.0
    %875 = vmatpush2.msra.mxu0 0.0
    %876 = vmatprep.subr.mxu0 0.0
    %877 = vmatpush2.msra.mxu0 0.0
    %878 = vmatprep.subr.mxu0 0.0
    %879 = vmatpush2.msra.mxu0 0.0
    %880 = vmatprep.subr.mxu0 0.0
    %881 = vmatpush2.msra.mxu0 0.0
    %882 = vmatprep.subr.mxu0 0.0
    %883 = vmatpush2.msra.mxu0 0.0
    %884 = vmatprep.subr.mxu0 0.0
    %885 = vmatpush2.msra.mxu0 0.0
    %886 = vmatprep.mubr.f32.mxu0 0.0
    %887 = vmatmul.mubr.f32.gmra.mxu0 %v817
    %v888 = vpop.f32.mrf.mxu0
    %v889 = vadd.f32 %v815, %v888
    %v890 = vpop.f32.mrf.mxu0
    %891 = vmatprep.mubr.f32.mxu0 0.0
    %892 = vmatmul.mubr.f32.gmra.mxu0 %v820
    %v893 = vpop.f32.mrf.mxu0
    %v894 = vadd.f32 %v815, %v893
    %v895 = vpop.f32.mrf.mxu0
    %896 = vdwg.mxu0
    %v897 = vsel %vm96, %v889, 0.0
    %898 = vadd.xlane.f32.xlu0 %v897
    %v899 = vpop.xlane.xlu0 %898
    %v900 = vsel %vm96, %v894, 0.0
    %901 = vadd.xlane.f32.xlu0 %v900
    %v902 = vpop.xlane.xlu0 %901
    %v903 = vmul.f32 %v899, %v103
    %v904 = vmul.f32 %v902, %v103
    %v905 = vsub.f32 %v889, %v903
    %v906 = vsub.f32 %v894, %v904
    %v907 = vmul.f32 %v905, %v905
    %v908 = vmul.f32 %v906, %v906
    %v909 = vsel %vm96, %v907, 0.0
    %910 = vadd.xlane.f32.xlu0 %v909
    %v911 = vpop.xlane.xlu0 %910
    %v912 = vsel %vm96, %v908, 0.0
    %913 = vadd.xlane.f32.xlu0 %v912
    %v914 = vpop.xlane.xlu0 %913
    %v915 = vmul.f32 %v911, %v103
    %v916 = vmul.f32 %v914, %v103
    %v917 = vadd.f32 %v915, 1e-05
    %v918 = vadd.f32 %v916, 1e-05
    %v919 = vrsqrt.pop %v917
    %v920 = vrsqrt.pop %v918
    %v921 = vmul.f32 %v905, %v919
    %v922 = vmul.f32 %v906, %v920
    %v923 = vlaneseq
    %v924 = vshrl.u32 %v923, 7
    %v925 = vsub.s32 3, %v924
    %v926 = vrot.slane %v95, %v925
    %v927 = vmul.f32 %v921, %v926
    %v928 = vmul.f32 %v922, %v926
    %v929 = vlaneseq
    %v930 = vshrl.u32 %v929, 7
    %v931 = vsub.s32 4, %v930
    %v932 = vrot.slane %v95, %v931
    %v933 = vadd.f32 %v927, %v932
    %v934 = vadd.f32 %v928, %v932
    %v935 = vadd.f32 %v134, %v933
    %v936 = vadd.f32 %v135, %v934
    %v937 = vld [vmem:[#allocation8] sm:$0xff]
    %v938 = vld [vmem:[#allocation8 + $0x8] sm:$0xff]
    %v939 = vld [vmem:[#allocation8 + $0x10] sm:$0xff]
    %v940 = vld [vmem:[#allocation8 + $0x18] sm:$0xff]
    %v941 = vld [vmem:[%s8] sm:$0x1]
    %v943 = vlaneseq
    %v944 = vshrl.u32 %v943, 7
    %v945 = vsub.s32 0, %v944
    %v946 = vrot.slane %v941, %v945
    %v949 = vsel %vm96, %v935, 0
    %v952 = vsel %vm96, %v936, 0
    %954 = vmatprep.subr.mxu0 0.0
    %955 = vmatpush1.msra.mxu0 0.0
    %956 = vmatprep.subr.mxu0 0.0
    %957 = vmatpush1.msra.mxu0 0.0
    %958 = vmatprep.subr.mxu0 0.0
    %959 = vmatpush1.msra.mxu0 0.0
    %960 = vmatprep.subr.mxu0 0.0
    %961 = vmatpush1.msra.mxu0 0.0
    %962 = vmatprep.subr.mxu0 0.0
    %963 = vmatpush1.msra.mxu0 0.0
    %964 = vmatprep.subr.mxu0 0.0
    %965 = vmatpush1.msra.mxu0 0.0
    %966 = vmatprep.subr.mxu0 0.0
    %967 = vmatpush1.msra.mxu0 0.0
    %968 = vmatprep.subr.mxu0 0.0
    %969 = vmatpush1.msra.mxu0 0.0
    %970 = vmatprep.subr.mxu0 0.0
    %971 = vmatpush1.msra.mxu0 0.0
    %972 = vmatprep.subr.mxu0 0.0
    %973 = vmatpush1.msra.mxu0 0.0
    %974 = vmatprep.subr.mxu0 0.0
    %975 = vmatpush1.msra.mxu0 0.0
    %976 = vmatprep.subr.mxu0 0.0
    %977 = vmatpush1.msra.mxu0 0.0
    %978 = vmatprep.subr.mxu0 0.0
    %979 = vmatpush1.msra.mxu0 %v940
    %980 = vmatprep.subr.mxu0 0.0
    %981 = vmatpush1.msra.mxu0 %v939
    %982 = vmatprep.subr.mxu0 0.0
    %983 = vmatpush1.msra.mxu0 %v938
    %984 = vmatprep.subr.mxu0 0.0
    %985 = vmatpush1.msra.mxu0 %v937
    %986 = vmatprep.subr.mxu0 0.0
    %987 = vmatpush2.msra.mxu0 0.0
    %988 = vmatprep.subr.mxu0 0.0
    %989 = vmatpush2.msra.mxu0 0.0
    %990 = vmatprep.subr.mxu0 0.0
    %991 = vmatpush2.msra.mxu0 0.0
    %992 = vmatprep.subr.mxu0 0.0
    %993 = vmatpush2.msra.mxu0 0.0
    %994 = vmatprep.subr.mxu0 0.0
    %995 = vmatpush2.msra.mxu0 0.0
    %996 = vmatprep.subr.mxu0 0.0
    %997 = vmatpush2.msra.mxu0 0.0
    %998 = vmatprep.subr.mxu0 0.0
    %999 = vmatpush2.msra.mxu0 0.0
    %1000 = vmatprep.subr.mxu0 0.0
    %1001 = vmatpush2.msra.mxu0 0.0
    %1002 = vmatprep.subr.mxu0 0.0
    %1003 = vmatpush2.msra.mxu0 0.0
    %1004 = vmatprep.subr.mxu0 0.0
    %1005 = vmatpush2.msra.mxu0 0.0
    %1006 = vmatprep.subr.mxu0 0.0
    %1007 = vmatpush2.msra.mxu0 0.0
    %1008 = vmatprep.subr.mxu0 0.0
    %1009 = vmatpush2.msra.mxu0 0.0
    %1010 = vmatprep.subr.mxu0 0.0
    %1011 = vmatpush2.msra.mxu0 0.0
    %1012 = vmatprep.subr.mxu0 0.0
    %1013 = vmatpush2.msra.mxu0 0.0
    %1014 = vmatprep.subr.mxu0 0.0
    %1015 = vmatpush2.msra.mxu0 0.0
    %1016 = vmatprep.subr.mxu0 0.0
    %1017 = vmatpush2.msra.mxu0 0.0
    %1018 = vmatprep.mubr.f32.mxu0 0.0
    %1019 = vmatmul.mubr.f32.gmra.mxu0 %v949
    %v1020 = vpop.f32.mrf.mxu0
    %v1021 = vadd.f32 %v946, %v1020
    %v1022 = vpop.f32.mrf.mxu0
    %1023 = vmatprep.mubr.f32.mxu0 0.0
    %1024 = vmatmul.mubr.f32.gmra.mxu0 %v952
    %v1025 = vpop.f32.mrf.mxu0
    %v1026 = vadd.f32 %v946, %v1025
    %v1027 = vpop.f32.mrf.mxu0
    %1028 = vdwg.mxu0
    %v1029 = vmul.f32 %v1021, 0.5
    %v1030 = vmul.f32 %v1026, 0.5
    %v1031 = vmul.f32 %v1021, 0.70710677
    %v1032 = vmul.f32 %v1026, 0.70710677
    %vm1033 = vcmp.lt.f32.partialorder %v1031, 0.0
    %vm1034 = vcmp.lt.f32.partialorder %v1032, 0.0
    %v1035 = vsel %vm1033, -1.0, 1.0
    %v1036 = vsel %vm1034, -1.0, 1.0
    %v1037 = vand.u32 2147483647, %v1031
    %v1038 = vand.u32 2147483647, %v1032
    %v1039 = vmul.f32 %v1037, 0.3275911
    %v1040 = vmul.f32 %v1038, 0.3275911
    %v1041 = vadd.f32 %v1039, 1.0
    %v1042 = vadd.f32 %v1040, 1.0
    %v1043 = vrcp.pop %v1041
    %v1044 = vrcp.pop %v1042
    %v1045 = vmul.f32 %v1043, 1.0614054
    %v1046 = vmul.f32 %v1044, 1.0614054
    %v1047 = vadd.f32 %v1045, -1.4531521
    %v1048 = vadd.f32 %v1046, -1.4531521
    %v1049 = vmul.f32 %v1047, %v1043
    %v1050 = vmul.f32 %v1048, %v1044
    %v1051 = vadd.f32 %v1049, 1.4214138
    %v1052 = vadd.f32 %v1050, 1.4214138
    %v1053 = vmul.f32 %v1051, %v1043
    %v1054 = vmul.f32 %v1052, %v1044
    %v1055 = vadd.f32 %v1053, -0.28449672
    %v1056 = vadd.f32 %v1054, -0.28449672
    %v1057 = vmul.f32 %v1055, %v1043
    %v1058 = vmul.f32 %v1056, %v1044
    %v1059 = vadd.f32 %v1057, 0.2548296
    %v1060 = vadd.f32 %v1058, 0.2548296
    %v1061 = vmul.f32 %v1059, %v1043
    %v1062 = vmul.f32 %v1060, %v1044
    %v1063 = vsub.f32 0.0, %v1037
    %v1064 = vsub.f32 0.0, %v1038
    %v1065 = vmul.f32 %v1063, %v1037
    %v1066 = vmul.f32 %v1064, %v1038
    %v1067 = vmul.f32 %v1065, 1.442695
    %v1068 = vpow.pop %v1067
    %v1069 = vmul.f32 %v1066, 1.442695
    %v1070 = vpow.pop %v1069
    %v1071 = vmul.f32 %v1061, %v1068
    %v1072 = vmul.f32 %v1062, %v1070
    %v1073 = vsub.f32 1.0, %v1071
    %v1074 = vsub.f32 1.0, %v1072
    %v1075 = vmul.f32 %v1035, %v1073
    %v1076 = vmul.f32 %v1036, %v1074
    %v1077 = vadd.f32 %v1075, 1.0
    %v1078 = vadd.f32 %v1076, 1.0
    %v1079 = vmul.f32 %v1029, %v1077
    %v1080 = vmul.f32 %v1030, %v1078
    %v1081 = vld [vmem:[%s9] sm:$0xff]
    %v1082 = vld [vmem:[%s9 + $0x8] sm:$0xff]
    %v1083 = vld [vmem:[%s9 + $0x10] sm:$0xff]
    %v1084 = vld [vmem:[%s9 + $0x18] sm:$0xff]
    %v1085 = vld [vmem:[%s9 + $0x20] sm:$0xff]
    %v1086 = vld [vmem:[%s9 + $0x28] sm:$0xff]
    %v1087 = vld [vmem:[%s9 + $0x30] sm:$0xff]
    %v1088 = vld [vmem:[%s9 + $0x38] sm:$0xff]
    %v1089 = vlaneseq
    %v1090 = vshrl.u32 %v1089, 7
    %v1091 = vsub.s32 5, %v1090
    %v1092 = vrot.slane %v95, %v1091
    %vm1093 = vcmask 523264
    %v1095 = vsel %vm1093, %v1079, 0
    %v1098 = vsel %vm1093, %v1080, 0
    %1100 = vmatprep.subr.mxu0 0.0
    %1101 = vmatpush1.msra.mxu0 0.0
    %1102 = vmatprep.subr.mxu0 0.0
    %1103 = vmatpush1.msra.mxu0 0.0
    %1104 = vmatprep.subr.mxu0 0.0
    %1105 = vmatpush1.msra.mxu0 0.0
    %1106 = vmatprep.subr.mxu0 0.0
    %1107 = vmatpush1.msra.mxu0 0.0
    %1108 = vmatprep.subr.mxu0 0.0
    %1109 = vmatpush1.msra.mxu0 0.0
    %1110 = vmatprep.subr.mxu0 0.0
    %1111 = vmatpush1.msra.mxu0 0.0
    %1112 = vmatprep.subr.mxu0 0.0
    %1113 = vmatpush1.msra.mxu0 0.0
    %1114 = vmatprep.subr.mxu0 0.0
    %1115 = vmatpush1.msra.mxu0 0.0
    %1116 = vmatprep.subr.mxu0 0.0
    %1117 = vmatpush1.msra.mxu0 %v1088
    %1118 = vmatprep.subr.mxu0 0.0
    %1119 = vmatpush1.msra.mxu0 %v1087
    %1120 = vmatprep.subr.mxu0 0.0
    %1121 = vmatpush1.msra.mxu0 %v1086
    %1122 = vmatprep.subr.mxu0 0.0
    %1123 = vmatpush1.msra.mxu0 %v1085
    %1124 = vmatprep.subr.mxu0 0.0
    %1125 = vmatpush1.msra.mxu0 %v1084
    %1126 = vmatprep.subr.mxu0 0.0
    %1127 = vmatpush1.msra.mxu0 %v1083
    %1128 = vmatprep.subr.mxu0 0.0
    %1129 = vmatpush1.msra.mxu0 %v1082
    %1130 = vmatprep.subr.mxu0 0.0
    %1131 = vmatpush1.msra.mxu0 %v1081
    %1132 = vmatprep.subr.mxu0 0.0
    %1133 = vmatpush2.msra.mxu0 0.0
    %1134 = vmatprep.subr.mxu0 0.0
    %1135 = vmatpush2.msra.mxu0 0.0
    %1136 = vmatprep.subr.mxu0 0.0
    %1137 = vmatpush2.msra.mxu0 0.0
    %1138 = vmatprep.subr.mxu0 0.0
    %1139 = vmatpush2.msra.mxu0 0.0
    %1140 = vmatprep.subr.mxu0 0.0
    %1141 = vmatpush2.msra.mxu0 0.0
    %1142 = vmatprep.subr.mxu0 0.0
    %1143 = vmatpush2.msra.mxu0 0.0
    %1144 = vmatprep.subr.mxu0 0.0
    %1145 = vmatpush2.msra.mxu0 0.0
    %1146 = vmatprep.subr.mxu0 0.0
    %1147 = vmatpush2.msra.mxu0 0.0
    %1148 = vmatprep.subr.mxu0 0.0
    %1149 = vmatpush2.msra.mxu0 0.0
    %1150 = vmatprep.subr.mxu0 0.0
    %1151 = vmatpush2.msra.mxu0 0.0
    %1152 = vmatprep.subr.mxu0 0.0
    %1153 = vmatpush2.msra.mxu0 0.0
    %1154 = vmatprep.subr.mxu0 0.0
    %1155 = vmatpush2.msra.mxu0 0.0
    %1156 = vmatprep.subr.mxu0 0.0
    %1157 = vmatpush2.msra.mxu0 0.0
    %1158 = vmatprep.subr.mxu0 0.0
    %1159 = vmatpush2.msra.mxu0 0.0
    %1160 = vmatprep.subr.mxu0 0.0
    %1161 = vmatpush2.msra.mxu0 0.0
    %1162 = vmatprep.subr.mxu0 0.0
    %1163 = vmatpush2.msra.mxu0 0.0
    %1164 = vmatprep.mubr.f32.mxu0 0.0
    %1165 = vmatmul.mubr.f32.gmra.mxu0 %v1095
    %v1166 = vpop.f32.mrf.mxu0
    %v1167 = vadd.f32 %v1092, %v1166
    %v1168 = vpop.f32.mrf.mxu0
    %1169 = vmatprep.mubr.f32.mxu0 0.0
    %1170 = vmatmul.mubr.f32.gmra.mxu0 %v1098
    %v1171 = vpop.f32.mrf.mxu0
    %v1172 = vadd.f32 %v1092, %v1171
    %v1173 = vpop.f32.mrf.mxu0
    %1174 = vdwg.mxu0
    %v1175 = vsel %vm96, %v1167, 0.0
    %1176 = vadd.xlane.f32.xlu0 %v1175
    %v1177 = vpop.xlane.xlu0 %1176
    %v1178 = vsel %vm96, %v1172, 0.0
    %1179 = vadd.xlane.f32.xlu0 %v1178
    %v1180 = vpop.xlane.xlu0 %1179
    %v1181 = vmul.f32 %v1177, %v103
    %v1182 = vmul.f32 %v1180, %v103
    %v1183 = vsub.f32 %v1167, %v1181
    %v1184 = vsub.f32 %v1172, %v1182
    %v1185 = vmul.f32 %v1183, %v1183
    %v1186 = vmul.f32 %v1184, %v1184
    %v1187 = vsel %vm96, %v1185, 0.0
    %1188 = vadd.xlane.f32.xlu0 %v1187
    %v1189 = vpop.xlane.xlu0 %1188
    %v1190 = vsel %vm96, %v1186, 0.0
    %1191 = vadd.xlane.f32.xlu0 %v1190
    %v1192 = vpop.xlane.xlu0 %1191
    %v1193 = vmul.f32 %v1189, %v103
    %v1194 = vmul.f32 %v1192, %v103
    %v1195 = vadd.f32 %v1193, 1e-05
    %v1196 = vadd.f32 %v1194, 1e-05
    %v1197 = vrsqrt.pop %v1195
    %v1198 = vrsqrt.pop %v1196
    %v1199 = vmul.f32 %v1183, %v1197
    %v1200 = vmul.f32 %v1184, %v1198
    %v1201 = vlaneseq
    %v1202 = vshrl.u32 %v1201, 7
    %v1203 = vsub.s32 6, %v1202
    %v1204 = vrot.slane %v95, %v1203
    %v1205 = vmul.f32 %v1199, %v1204
    %v1206 = vmul.f32 %v1200, %v1204
    %v1207 = vlaneseq
    %v1208 = vshrl.u32 %v1207, 7
    %v1209 = vsub.s32 7, %v1208
    %v1210 = vrot.slane %v95, %v1209
    %v1211 = vadd.f32 %v1205, %v1210
    %v1212 = vadd.f32 %v1206, %v1210
    %v1213 = vadd.f32 %v1211, %v935
    %v1214 = vadd.f32 %v1212, %v936
    %1215 = vst.msk [vmem:[#allocation10] sm:$0xff] %vm96, %v1213
    %1216 = vst.msk [vmem:[#allocation10 + $0x8] sm:$0xff] %vm96, %v1214
    // Predicated region
    $region58: #{tpu_custom_call.1} parent=1 // pred_check
      _
    $region59: #{tpu_custom_call.1} parent=1 // pred_check_branch
      %1218 = sbr.rel (0) target = $region61
    $region60: #{tpu_custom_call.1} parent=1 // pred_region
      %s1220 = ssub.s32 256, 256
      %1221 = vsyncadd [#allocation4], %s1220
      %s1222 = sshll.u32 [#allocation10], 4
      %s1223 = int_to_ptr.vmem [resolvable:$true] %s1222
      %1228 = dma.vmem_to_hbm [thread:$0]  %s1223, 256, %s10, [#allocation4], 128, 128, 8
    $region61: #{tpu_custom_call.1} parent=1 // pred_fallthru
      _
    // Predicated region
    $region62: #{tpu_custom_call.1} parent=1 // pred_check
      _
    $region63: #{tpu_custom_call.1} parent=1 // pred_check_branch
      %1230 = sbr.rel (0) target = $region65
    $region64: #{tpu_custom_call.1} parent=1 // pred_region
      %1231 = dma.done [#allocation4], 256
    $region65: #{tpu_custom_call.1} parent=1 // pred_fallthru
      _
    %1232 = vsyncpa [#allocation3], 1
    %1233 = vsyncpa [#allocation6], 1
    %1234 = vsyncpa [#allocation9], 1
    %1235 = vsyncpa [#allocation4], 1

</llo_original>
